<compile_context>
chip_gen: v7x
topology: tpu7x:2x2x1
jax: 0.10.0
libtpu: 0.0.40
codegen_flags: <defaults>
</compile_context>

<pallas_src>
import numpy as np
import jax
import jax.numpy as jnp
from jax import lax
from jax.experimental import pallas as pl
from jax.experimental.pallas import tpu as pltpu


# ------------------------------ Pallas kernel -------------------------------

def _softmax(x, axis):
    m = jnp.max(x, axis=axis, keepdims=True)
    e = jnp.exp(x - m)
    return e * pl.reciprocal(jnp.sum(e, axis=axis, keepdims=True), approx=True)


def make_attn_ff_kernel(heads, key_dim, value_dim, batch_block, n):
    dk = heads * key_dim
    dv = heads * value_dim
    bf16 = jnp.bfloat16

    def kernel(x_ref, wqkv_ref, bqkv_ref, wo_ref, bo_ref,
               w1_ref, b1_ref, w2_ref, b2_ref, o_ref):
        # x_ref: (C, Bblk*N) — channels-major slab for Bblk images, lane-dense on Bblk*N.
        x = x_ref[...]                                   # f32
        x16 = x.astype(bf16)

        # Fused q/k/v 1x1-conv projection. key_dim**-0.25 is pre-folded into the q/k rows.
        qkv = jnp.dot(wqkv_ref[...], x16,
                      preferred_element_type=jnp.float32) + bqkv_ref[...]
        q = qkv[:dk, :]
        k = qkv[dk:2 * dk, :]
        v = qkv[2 * dk:, :]

        # softmax over key_dim (norm_queries=True) is position-wise -> do it batched.
        qh = _softmax(q.reshape(heads, key_dim, batch_block * n), axis=1)
        kh = k.reshape(heads, key_dim, batch_block * n)
        vh = v.reshape(heads, value_dim, batch_block * n)

        # Per-image attention core (spatial softmax + N-contraction must not mix images).
        outs = []
        for bi in range(batch_block):                    # static unroll
            sl = slice(bi * n, (bi + 1) * n)             # lane slice, 128-aligned
            kb = _softmax(kh[:, :, sl], axis=-1)         # softmax over spatial positions
            qb = qh[:, :, sl]
            vb = vh[:, :, sl]
            # ctx[h, d, e] = sum_n kb[h, d, n] * vb[h, e, n]
            ctx = lax.dot_general(kb.astype(bf16), vb.astype(bf16),
                                  (((2,), (2,)), ((0,), (0,))),
                                  preferred_element_type=jnp.float32)   # (H, Dk, Dv)
            # out[h, e, n] = sum_d ctx[h, d, e] * qb[h, d, n]
            ob = lax.dot_general(ctx.astype(bf16), qb.astype(bf16),
                                 (((1,), (1,)), ((0,), (0,))),
                                 preferred_element_type=jnp.float32)    # (H, Dv, n)
            outs.append(ob.reshape(dv, n))
        out_all = outs[0] if batch_block == 1 else jnp.concatenate(outs, axis=-1)

        # to_out 1x1 conv (+ residual). Rezero gain g_attn is pre-folded into wo/bo.
        y = jnp.dot(wo_ref[...], out_all.astype(bf16),
                    preferred_element_type=jnp.float32) + bo_ref[...] + x

        # feed-forward: Conv1x1(C->2C) -> LeakyReLU(0.2) -> Conv1x1(2C->C) (+ residual).
        # Rezero gain g_ff is pre-folded into w2/b2.
        h1 = jnp.dot(w1_ref[...], y.astype(bf16),
                     preferred_element_type=jnp.float32) + b1_ref[...]
        h1 = jnp.where(h1 > 0, h1, 0.2 * h1)
        h2 = jnp.dot(w2_ref[...], h1.astype(bf16),
                     preferred_element_type=jnp.float32) + b2_ref[...]
        o_ref[...] = h2 + y

    return kernel


# --------------------------------- wrapper ----------------------------------

def attn_and_ff_forward(x, params, *, heads, key_dim, value_dim, batch_block=None):
    b, c, h, w = x.shape
    n = h * w
    dk = heads * key_dim
    dv = heads * value_dim
    bblk = b if batch_block is None else batch_block
    assert b % bblk == 0, (b, bblk)

    f32, bf16 = jnp.float32, jnp.bfloat16
    scale = jnp.float32(float(key_dim) ** -0.25)
    col = lambda t: t.reshape(-1, 1).astype(f32)

    # Layout plumbing (tiny XLA ops): NCHW -> channels-major, lane-dense (C, B*N).
    x2 = jnp.transpose(x.reshape(b, c, n), (1, 0, 2)).reshape(c, b * n)

    # Parameter folds (tiny XLA ops, hoisted out of the kernel):
    #  * key_dim**-0.25 into wq/bq and wk/bk,
    #  * q/k/v weights fused into one matrix,
    #  * Rezero gains into the trailing linear of each branch,
    #  * matmul weights cast once to bf16 (biases stay f32, added post-accumulation).
    wqkv = jnp.concatenate(
        [params["wq"] * scale, params["wk"] * scale, params["wv"]], axis=0).astype(bf16)
    bqkv = jnp.concatenate(
        [params["bq"] * scale, params["bk"] * scale, params["bv"]], axis=0).reshape(-1, 1).astype(f32)
    wo = (params["wo"] * params["g_attn"]).astype(bf16)
    bo = col(params["bo"] * params["g_attn"])
    w1 = params["w1"].astype(bf16)
    b1 = col(params["b1"])
    w2 = (params["w2"] * params["g_ff"]).astype(bf16)
    b2 = col(params["b2"] * params["g_ff"])

    oqkv = 2 * dk + dv
    const2 = lambda i: (0, 0)

    out2 = pl.pallas_call(
        make_attn_ff_kernel(heads, key_dim, value_dim, bblk, n),
        out_shape=jax.ShapeDtypeStruct((c, b * n), jnp.float32),
        grid=(b // bblk,),
        in_specs=[
            pl.BlockSpec((c, bblk * n), lambda i: (0, i)),   # x slab   (C, Bblk*N)
            pl.BlockSpec((oqkv, c), const2),                 # wqkv (bf16, scale folded)
            pl.BlockSpec((oqkv, 1), const2),                 # bqkv (f32, scale folded)
            pl.BlockSpec((c, dv), const2),                   # wo   (bf16, g_attn folded)
            pl.BlockSpec((c, 1), const2),                    # bo   (g_attn folded)
            pl.BlockSpec((2 * c, c), const2),                # w1   (bf16)
            pl.BlockSpec((2 * c, 1), const2),                # b1
            pl.BlockSpec((c, 2 * c), const2),                # w2   (bf16, g_ff folded)
            pl.BlockSpec((c, 1), const2),                    # b2   (g_ff folded)
        ],
        out_specs=pl.BlockSpec((c, bblk * n), lambda i: (0, i)),
        compiler_params=pltpu.CompilerParams(dimension_semantics=("parallel",)),
    )(x2, wqkv, bqkv, wo, bo, w1, b1, w2, b2)

    # Back to NCHW.
    return jnp.transpose(out2.reshape(c, b, n), (1, 0, 2)).reshape(b, c, h, w)

# TODO(synk): require_attn=True path (returning the attention map from the aggan
# ImageLinearAttention variant) is not implemented; only the default forward is.


# ------------------------------ numpy reference ------------------------------

def reference(x, p, heads, key_dim, value_dim):
    x = np.asarray(x, np.float32)
    b, c, h, w = x.shape
    n = h * w
    xf = x.reshape(b, c, n)

    def conv1x1(wt, bt, inp):
        return np.einsum("oc,bcn->bon", np.asarray(wt), inp) + np.asarray(bt)[None, :, None]

    def softmax(a, axis):
        m = a.max(axis=axis, keepdims=True)
        e = np.exp(a - m)
        return e / e.sum(axis=axis, keepdims=True)

    scale = float(key_dim) ** -0.25
    q = conv1x1(p["wq"], p["bq"], xf).reshape(b, heads, key_dim, n) * scale
    k = conv1x1(p["wk"], p["bk"], xf).reshape(b, heads, key_dim, n) * scale
    v = conv1x1(p["wv"], p["bv"], xf).reshape(b, heads, value_dim, n)

    k = softmax(k, axis=-1)
    q = softmax(q, axis=2)

    ctx = np.einsum("bhdn,bhen->bhde", k, v)
    out = np.einsum("bhdn,bhde->bhen", q, ctx).reshape(b, heads * value_dim, n)

    attn = conv1x1(p["wo"], p["bo"], out)
    y = float(p["g_attn"]) * attn + xf

    h1 = conv1x1(p["w1"], p["b1"], y)
    h1 = np.where(h1 > 0, h1, 0.2 * h1)
    h2 = conv1x1(p["w2"], p["b2"], h1)
    z = float(p["g_ff"]) * h2 + y
    return z.reshape(b, c, h, w)


# ------------------------------------ main ------------------------------------

if __name__ == "__main__":
    B, C, H, W = 4, 4, 16, 16
    # Small demo head config (PyTorch defaults are heads=8, key/value_dim=32/64;
    # the kernel is parametric in these).
    HEADS, KEY_DIM, VALUE_DIM = 2, 32, 32
    DK, DV = HEADS * KEY_DIM, HEADS * VALUE_DIM

    key = jax.random.PRNGKey(0)
    ks = jax.random.split(key, 14)

    def init(k, shape, fan_in):
        return jax.random.normal(k, shape, jnp.float32) / np.float32(np.sqrt(fan_in))

    params = {
        "wq": init(ks[0], (DK, C), C), "bq": init(ks[1], (DK,), C),
        "wk": init(ks[2], (DK, C), C), "bk": init(ks[3], (DK,), C),
        "wv": init(ks[4], (DV, C), C), "bv": init(ks[5], (DV,), C),
        "wo": init(ks[6], (C, DV), DV), "bo": init(ks[7], (C,), DV),
        "w1": init(ks[8], (2 * C, C), C), "b1": init(ks[9], (2 * C,), C),
        "w2": init(ks[10], (C, 2 * C), 2 * C), "b2": init(ks[11], (C,), 2 * C),
        # Rezero initializes these to 0 (forward == identity); use nonzero values
        # here so the kernel path is actually exercised by the test.
        "g_attn": jnp.float32(0.5),
        "g_ff": jnp.float32(0.25),
    }

    x = jax.random.normal(ks[12], (B, C, H, W), jnp.float32)

    fwd = jax.jit(attn_and_ff_forward,
                  static_argnames=("heads", "key_dim", "value_dim", "batch_block"))
    out = fwd(x, params, heads=HEADS, key_dim=KEY_DIM, value_dim=VALUE_DIM,
              batch_block=2)   # 2 images per grid step -> grid=(2,)
    out = jax.block_until_ready(out)

    ref = reference(x, params, HEADS, KEY_DIM, VALUE_DIM)

    assert out.shape == (B, C, H, W), out.shape
    # bf16 matmul operands (f32 accumulation) -> slightly looser tolerance than pure f32.
    np.testing.assert_allclose(np.asarray(out), ref, rtol=3e-2, atol=3e-2)

    print("KERNEL_OK")
</pallas_src>

<mosaic_0001>
module attributes {stable_mosaic.version = 11 : i64} {
  func.func @kernel(%arg0: i32, %arg1: memref<4x512xf32, #tpu.memory_space<vmem>>, %arg2: memref<192x4xbf16, #tpu.memory_space<vmem>>, %arg3: memref<192x1xf32, #tpu.memory_space<vmem>>, %arg4: memref<4x64xbf16, #tpu.memory_space<vmem>>, %arg5: memref<4x1xf32, #tpu.memory_space<vmem>>, %arg6: memref<8x4xbf16, #tpu.memory_space<vmem>>, %arg7: memref<8x1xf32, #tpu.memory_space<vmem>>, %arg8: memref<4x8xbf16, #tpu.memory_space<vmem>>, %arg9: memref<4x1xf32, #tpu.memory_space<vmem>>, %arg10: memref<4x512xf32, #tpu.memory_space<vmem>>) attributes {dimension_semantics = [#tpu.dimension_semantics<parallel>], iteration_bounds = array<i64: 2>, scalar_prefetch = 0 : i64, scratch_operands = 0 : i64, tpu.core_type = #tpu.core_type<tc>, window_params = [{transform_indices = @transform_0, window_bounds = array<i64: 4, 512>}, {pipeline_mode = #tpu.pipeline_mode<synchronous>, transform_indices = @transform_1, window_bounds = array<i64: 192, 4>}, {pipeline_mode = #tpu.pipeline_mode<synchronous>, transform_indices = @transform_2, window_bounds = array<i64: 192, 1>}, {pipeline_mode = #tpu.pipeline_mode<synchronous>, transform_indices = @transform_3, window_bounds = array<i64: 4, 64>}, {pipeline_mode = #tpu.pipeline_mode<synchronous>, transform_indices = @transform_4, window_bounds = array<i64: 4, 1>}, {pipeline_mode = #tpu.pipeline_mode<synchronous>, transform_indices = @transform_5, window_bounds = array<i64: 8, 4>}, {pipeline_mode = #tpu.pipeline_mode<synchronous>, transform_indices = @transform_6, window_bounds = array<i64: 8, 1>}, {pipeline_mode = #tpu.pipeline_mode<synchronous>, transform_indices = @transform_7, window_bounds = array<i64: 4, 8>}, {pipeline_mode = #tpu.pipeline_mode<synchronous>, transform_indices = @transform_8, window_bounds = array<i64: 4, 1>}, {transform_indices = @transform_9, window_bounds = array<i64: 4, 512>}]} {
    %c0 = arith.constant 0 : index
    %c0_0 = arith.constant 0 : index
    %0 = vector.load %arg1[%c0, %c0_0] : memref<4x512xf32, #tpu.memory_space<vmem>>, vector<4x512xf32>
    %1 = arith.truncf %0 : vector<4x512xf32> to vector<4x512xbf16>
    %c0_1 = arith.constant 0 : index
    %c0_2 = arith.constant 0 : index
    %2 = vector.load %arg2[%c0_1, %c0_2] : memref<192x4xbf16, #tpu.memory_space<vmem>>, vector<192x4xbf16>
    %cst = arith.constant dense<0.000000e+00> : vector<192x512xf32>
    %3 = tpu.matmul %2, %1, %cst {dimension_numbers = #tpu.dot_dimension_numbers<[1], [0], [0], [1], [0, 0, 1, 1], [], []>} : vector<192x4xbf16>, vector<4x512xbf16>, vector<192x512xf32> -> vector<192x512xf32>
    %c0_3 = arith.constant 0 : index
    %c0_4 = arith.constant 0 : index
    %4 = vector.load %arg3[%c0_3, %c0_4] : memref<192x1xf32, #tpu.memory_space<vmem>>, vector<192x1xf32>
    %5 = vector.broadcast %4 : vector<192x1xf32> to vector<192x512xf32>
    %6 = arith.addf %3, %5 : vector<192x512xf32>
    %7 = vector.extract_strided_slice %6 {offsets = [0, 0], sizes = [64, 512], strides = [1, 1]} : vector<192x512xf32> to vector<64x512xf32>
    %8 = vector.extract_strided_slice %6 {offsets = [64, 0], sizes = [64, 512], strides = [1, 1]} : vector<192x512xf32> to vector<64x512xf32>
    %9 = vector.extract_strided_slice %6 {offsets = [128, 0], sizes = [64, 512], strides = [1, 1]} : vector<192x512xf32> to vector<64x512xf32>
    %10 = vector.shape_cast %7 : vector<64x512xf32> to vector<2x32x512xf32>
    %cst_5 = arith.constant dense<0xFF800000> : vector<2x512xf32>
    %11 = vector.multi_reduction <maximumf>, %10, %cst_5 [1] : vector<2x32x512xf32> to vector<2x512xf32>
    %12 = vector.shape_cast %11 : vector<2x512xf32> to vector<2x1x512xf32>
    %13 = vector.broadcast %12 : vector<2x1x512xf32> to vector<2x32x512xf32>
    %14 = arith.subf %10, %13 : vector<2x32x512xf32>
    %15 = math.exp %14 : vector<2x32x512xf32>
    %cst_6 = arith.constant dense<0.000000e+00> : vector<2x512xf32>
    %16 = vector.multi_reduction <add>, %15, %cst_6 [1] : vector<2x32x512xf32> to vector<2x512xf32>
    %17 = vector.shape_cast %16 : vector<2x512xf32> to vector<2x1x512xf32>
    %18 = tpu.reciprocal %17 {approx = true} : vector<2x1x512xf32> -> vector<2x1x512xf32>
    %19 = vector.broadcast %18 : vector<2x1x512xf32> to vector<2x32x512xf32>
    %20 = arith.mulf %15, %19 : vector<2x32x512xf32>
    %21 = vector.shape_cast %8 : vector<64x512xf32> to vector<2x32x512xf32>
    %22 = vector.shape_cast %9 : vector<64x512xf32> to vector<2x32x512xf32>
    %23 = vector.extract_strided_slice %21 {offsets = [0, 0, 0], sizes = [2, 32, 256], strides = [1, 1, 1]} : vector<2x32x512xf32> to vector<2x32x256xf32>
    %cst_7 = arith.constant dense<0xFF800000> : vector<2x32xf32>
    %24 = vector.multi_reduction <maximumf>, %23, %cst_7 [2] : vector<2x32x256xf32> to vector<2x32xf32>
    %25 = vector.shape_cast %24 : vector<2x32xf32> to vector<2x32x1xf32>
    %26 = vector.broadcast %25 : vector<2x32x1xf32> to vector<2x32x256xf32>
    %27 = arith.subf %23, %26 : vector<2x32x256xf32>
    %28 = math.exp %27 : vector<2x32x256xf32>
    %cst_8 = arith.constant dense<0.000000e+00> : vector<2x32xf32>
    %29 = vector.multi_reduction <add>, %28, %cst_8 [2] : vector<2x32x256xf32> to vector<2x32xf32>
    %30 = vector.shape_cast %29 : vector<2x32xf32> to vector<2x32x1xf32>
    %31 = tpu.reciprocal %30 {approx = true} : vector<2x32x1xf32> -> vector<2x32x1xf32>
    %32 = vector.broadcast %31 : vector<2x32x1xf32> to vector<2x32x256xf32>
    %33 = arith.mulf %28, %32 : vector<2x32x256xf32>
    %34 = vector.extract_strided_slice %20 {offsets = [0, 0, 0], sizes = [2, 32, 256], strides = [1, 1, 1]} : vector<2x32x512xf32> to vector<2x32x256xf32>
    %35 = vector.extract_strided_slice %22 {offsets = [0, 0, 0], sizes = [2, 32, 256], strides = [1, 1, 1]} : vector<2x32x512xf32> to vector<2x32x256xf32>
    %36 = arith.truncf %33 : vector<2x32x256xf32> to vector<2x32x256xbf16>
    %37 = arith.truncf %35 : vector<2x32x256xf32> to vector<2x32x256xbf16>
    %cst_9 = arith.constant dense<0.000000e+00> : vector<2x32x32xf32>
    %38 = tpu.matmul %36, %37, %cst_9 {dimension_numbers = #tpu.dot_dimension_numbers<[2], [2], [1], [1], [0, 0, 0, 1, 1, 1], [0], [0]>} : vector<2x32x256xbf16>, vector<2x32x256xbf16>, vector<2x32x32xf32> -> vector<2x32x32xf32>
    %39 = arith.truncf %38 : vector<2x32x32xf32> to vector<2x32x32xbf16>
    %40 = arith.truncf %34 : vector<2x32x256xf32> to vector<2x32x256xbf16>
    %cst_10 = arith.constant dense<0.000000e+00> : vector<2x32x256xf32>
    %41 = tpu.matmul %39, %40, %cst_10 {dimension_numbers = #tpu.dot_dimension_numbers<[1], [1], [2], [2], [0, 0, 0, 2, 1, 2], [0], [0]>} : vector<2x32x32xbf16>, vector<2x32x256xbf16>, vector<2x32x256xf32> -> vector<2x32x256xf32>
    %42 = vector.shape_cast %41 : vector<2x32x256xf32> to vector<64x256xf32>
    %43 = vector.extract_strided_slice %21 {offsets = [0, 0, 256], sizes = [2, 32, 256], strides = [1, 1, 1]} : vector<2x32x512xf32> to vector<2x32x256xf32>
    %cst_11 = arith.constant dense<0xFF800000> : vector<2x32xf32>
    %44 = vector.multi_reduction <maximumf>, %43, %cst_11 [2] : vector<2x32x256xf32> to vector<2x32xf32>
    %45 = vector.shape_cast %44 : vector<2x32xf32> to vector<2x32x1xf32>
    %46 = vector.broadcast %45 : vector<2x32x1xf32> to vector<2x32x256xf32>
    %47 = arith.subf %43, %46 : vector<2x32x256xf32>
    %48 = math.exp %47 : vector<2x32x256xf32>
    %cst_12 = arith.constant dense<0.000000e+00> : vector<2x32xf32>
    %49 = vector.multi_reduction <add>, %48, %cst_12 [2] : vector<2x32x256xf32> to vector<2x32xf32>
    %50 = vector.shape_cast %49 : vector<2x32xf32> to vector<2x32x1xf32>
    %51 = tpu.reciprocal %50 {approx = true} : vector<2x32x1xf32> -> vector<2x32x1xf32>
    %52 = vector.broadcast %51 : vector<2x32x1xf32> to vector<2x32x256xf32>
    %53 = arith.mulf %48, %52 : vector<2x32x256xf32>
    %54 = vector.extract_strided_slice %20 {offsets = [0, 0, 256], sizes = [2, 32, 256], strides = [1, 1, 1]} : vector<2x32x512xf32> to vector<2x32x256xf32>
    %55 = vector.extract_strided_slice %22 {offsets = [0, 0, 256], sizes = [2, 32, 256], strides = [1, 1, 1]} : vector<2x32x512xf32> to vector<2x32x256xf32>
    %56 = arith.truncf %53 : vector<2x32x256xf32> to vector<2x32x256xbf16>
    %57 = arith.truncf %55 : vector<2x32x256xf32> to vector<2x32x256xbf16>
    %cst_13 = arith.constant dense<0.000000e+00> : vector<2x32x32xf32>
    %58 = tpu.matmul %56, %57, %cst_13 {dimension_numbers = #tpu.dot_dimension_numbers<[2], [2], [1], [1], [0, 0, 0, 1, 1, 1], [0], [0]>} : vector<2x32x256xbf16>, vector<2x32x256xbf16>, vector<2x32x32xf32> -> vector<2x32x32xf32>
    %59 = arith.truncf %58 : vector<2x32x32xf32> to vector<2x32x32xbf16>
    %60 = arith.truncf %54 : vector<2x32x256xf32> to vector<2x32x256xbf16>
    %cst_14 = arith.constant dense<0.000000e+00> : vector<2x32x256xf32>
    %61 = tpu.matmul %59, %60, %cst_14 {dimension_numbers = #tpu.dot_dimension_numbers<[1], [1], [2], [2], [0, 0, 0, 2, 1, 2], [0], [0]>} : vector<2x32x32xbf16>, vector<2x32x256xbf16>, vector<2x32x256xf32> -> vector<2x32x256xf32>
    %62 = vector.shape_cast %61 : vector<2x32x256xf32> to vector<64x256xf32>
    %63 = tpu.concatenate %42, %62 in 1 : vector<64x256xf32>, vector<64x256xf32> -> vector<64x512xf32>
    %c0_15 = arith.constant 0 : index
    %c0_16 = arith.constant 0 : index
    %64 = vector.load %arg4[%c0_15, %c0_16] : memref<4x64xbf16, #tpu.memory_space<vmem>>, vector<4x64xbf16>
    %65 = arith.truncf %63 : vector<64x512xf32> to vector<64x512xbf16>
    %cst_17 = arith.constant dense<0.000000e+00> : vector<4x512xf32>
    %66 = tpu.matmul %64, %65, %cst_17 {dimension_numbers = #tpu.dot_dimension_numbers<[1], [0], [0], [1], [0, 0, 1, 1], [], []>} : vector<4x64xbf16>, vector<64x512xbf16>, vector<4x512xf32> -> vector<4x512xf32>
    %c0_18 = arith.constant 0 : index
    %c0_19 = arith.constant 0 : index
    %67 = vector.load %arg5[%c0_18, %c0_19] : memref<4x1xf32, #tpu.memory_space<vmem>>, vector<4x1xf32>
    %68 = vector.broadcast %67 : vector<4x1xf32> to vector<4x512xf32>
    %69 = arith.addf %66, %68 : vector<4x512xf32>
    %70 = arith.addf %69, %0 : vector<4x512xf32>
    %c0_20 = arith.constant 0 : index
    %c0_21 = arith.constant 0 : index
    %71 = vector.load %arg6[%c0_20, %c0_21] : memref<8x4xbf16, #tpu.memory_space<vmem>>, vector<8x4xbf16>
    %72 = arith.truncf %70 : vector<4x512xf32> to vector<4x512xbf16>
    %cst_22 = arith.constant dense<0.000000e+00> : vector<8x512xf32>
    %73 = tpu.matmul %71, %72, %cst_22 {dimension_numbers = #tpu.dot_dimension_numbers<[1], [0], [0], [1], [0, 0, 1, 1], [], []>} : vector<8x4xbf16>, vector<4x512xbf16>, vector<8x512xf32> -> vector<8x512xf32>
    %c0_23 = arith.constant 0 : index
    %c0_24 = arith.constant 0 : index
    %74 = vector.load %arg7[%c0_23, %c0_24] : memref<8x1xf32, #tpu.memory_space<vmem>>, vector<8x1xf32>
    %75 = vector.broadcast %74 : vector<8x1xf32> to vector<8x512xf32>
    %76 = arith.addf %73, %75 : vector<8x512xf32>
    %cst_25 = arith.constant 0.000000e+00 : f32
    %77 = vector.broadcast %cst_25 : f32 to vector<8x512xf32>
    %78 = arith.cmpf ogt, %76, %77 : vector<8x512xf32>
    %cst_26 = arith.constant 2.000000e-01 : f32
    %79 = vector.broadcast %cst_26 : f32 to vector<8x512xf32>
    %80 = arith.mulf %79, %76 : vector<8x512xf32>
    %81 = arith.select %78, %76, %80 : vector<8x512xi1>, vector<8x512xf32>
    %c0_27 = arith.constant 0 : index
    %c0_28 = arith.constant 0 : index
    %82 = vector.load %arg8[%c0_27, %c0_28] : memref<4x8xbf16, #tpu.memory_space<vmem>>, vector<4x8xbf16>
    %83 = arith.truncf %81 : vector<8x512xf32> to vector<8x512xbf16>
    %cst_29 = arith.constant dense<0.000000e+00> : vector<4x512xf32>
    %84 = tpu.matmul %82, %83, %cst_29 {dimension_numbers = #tpu.dot_dimension_numbers<[1], [0], [0], [1], [0, 0, 1, 1], [], []>} : vector<4x8xbf16>, vector<8x512xbf16>, vector<4x512xf32> -> vector<4x512xf32>
    %c0_30 = arith.constant 0 : index
    %c0_31 = arith.constant 0 : index
    %85 = vector.load %arg9[%c0_30, %c0_31] : memref<4x1xf32, #tpu.memory_space<vmem>>, vector<4x1xf32>
    %86 = vector.broadcast %85 : vector<4x1xf32> to vector<4x512xf32>
    %87 = arith.addf %84, %86 : vector<4x512xf32>
    %88 = arith.addf %87, %70 : vector<4x512xf32>
    %c0_32 = arith.constant 0 : index
    %c0_33 = arith.constant 0 : index
    %89 = vector.load %arg10[%c0_32, %c0_33] : memref<4x512xf32, #tpu.memory_space<vmem>>, vector<4x512xf32>
    tpu.vector_store %arg10[%c0_32, %c0_33], %88 {strides = array<i32>} : memref<4x512xf32, #tpu.memory_space<vmem>>, vector<4x512xf32>,
    return
  }
  func.func @transform_0(%arg0: i32) -> (i32, i32) {
    %c0_i32 = arith.constant 0 : i32
    %c0_i32_0 = arith.constant 0 : i32
    return %c0_i32, %arg0 : i32, i32
  }
  func.func @transform_1(%arg0: i32) -> (i32, i32) {
    %c0_i32 = arith.constant 0 : i32
    %c0_i32_0 = arith.constant 0 : i32
    %c0_i32_1 = arith.constant 0 : i32
    return %c0_i32, %c0_i32_0 : i32, i32
  }
  func.func @transform_2(%arg0: i32) -> (i32, i32) {
    %c0_i32 = arith.constant 0 : i32
    %c0_i32_0 = arith.constant 0 : i32
    %c0_i32_1 = arith.constant 0 : i32
    return %c0_i32, %c0_i32_0 : i32, i32
  }
  func.func @transform_3(%arg0: i32) -> (i32, i32) {
    %c0_i32 = arith.constant 0 : i32
    %c0_i32_0 = arith.constant 0 : i32
    %c0_i32_1 = arith.constant 0 : i32
    return %c0_i32, %c0_i32_0 : i32, i32
  }
  func.func @transform_4(%arg0: i32) -> (i32, i32) {
    %c0_i32 = arith.constant 0 : i32
    %c0_i32_0 = arith.constant 0 : i32
    %c0_i32_1 = arith.constant 0 : i32
    return %c0_i32, %c0_i32_0 : i32, i32
  }
  func.func @transform_5(%arg0: i32) -> (i32, i32) {
    %c0_i32 = arith.constant 0 : i32
    %c0_i32_0 = arith.constant 0 : i32
    %c0_i32_1 = arith.constant 0 : i32
    return %c0_i32, %c0_i32_0 : i32, i32
  }
  func.func @transform_6(%arg0: i32) -> (i32, i32) {
    %c0_i32 = arith.constant 0 : i32
    %c0_i32_0 = arith.constant 0 : i32
    %c0_i32_1 = arith.constant 0 : i32
    return %c0_i32, %c0_i32_0 : i32, i32
  }
  func.func @transform_7(%arg0: i32) -> (i32, i32) {
    %c0_i32 = arith.constant 0 : i32
    %c0_i32_0 = arith.constant 0 : i32
    %c0_i32_1 = arith.constant 0 : i32
    return %c0_i32, %c0_i32_0 : i32, i32
  }
  func.func @transform_8(%arg0: i32) -> (i32, i32) {
    %c0_i32 = arith.constant 0 : i32
    %c0_i32_0 = arith.constant 0 : i32
    %c0_i32_1 = arith.constant 0 : i32
    return %c0_i32, %c0_i32_0 : i32, i32
  }
  func.func @transform_9(%arg0: i32) -> (i32, i32) {
    %c0_i32 = arith.constant 0 : i32
    %c0_i32_0 = arith.constant 0 : i32
    return %c0_i32, %arg0 : i32, i32
  }
}

</mosaic_0001>

<llo_original>
// kernel: attn_and_ff_forward.1
$region0: #{attn_and_ff_forward.1}
  #allocation0 [shape = 'u32[]', space=smem, size = 0x4, offset = 0x4, fixed_abs, tag = 'smem constant byte address 0x4 - core index']
  #allocation1 [shape = 'u32[144,128]{1,0:T(1,128)}', space=vmem, size = 0x12000, scoped, tag = 'internal scratch']
  %s0 = inlined_call_operand.vmem [shape: f32[4,1024], index: 0, kind: input, shape index: {}]
  %s1 = inlined_call_operand.vmem [shape: bf16[192,4], index: 1, kind: input, shape index: {}]
  %s2 = inlined_call_operand.vmem [shape: f32[192,1], index: 2, kind: input, shape index: {}]
  %s3 = inlined_call_operand.vmem [shape: bf16[4,64], index: 3, kind: input, shape index: {}]
  %s4 = inlined_call_operand.vmem [shape: f32[4,1], index: 4, kind: input, shape index: {}]
  %s5 = inlined_call_operand.vmem [shape: bf16[8,4], index: 5, kind: input, shape index: {}]
  %s6 = inlined_call_operand.vmem [shape: f32[8,1], index: 6, kind: input, shape index: {}]
  %s7 = inlined_call_operand.vmem [shape: bf16[4,8], index: 7, kind: input, shape index: {}]
  %s8 = inlined_call_operand.vmem [shape: f32[4,1], index: 8, kind: input, shape index: {}]
  %s9 = inlined_call_operand.vmem [shape: f32[4,1024], index: 9, kind: output, shape index: {}]
  %s10 = sld [smem:[#allocation0]]
  $region69: #{attn_and_ff_forward.1} parent=0
    _
  %s12 = ssub.s32 1, %s10
  %s13 = scalar_select 0, %s12, %s10
  loop: start=0, step=1, limit=4
  $region2: #{attn_and_ff_forward.1} parent=0 // loop_pre_header
    _
  $region3: #{attn_and_ff_forward.1} parent=0 // loop_header
    %s15 = sphi 0, %s19
    %p16 = scmp.ge.s32.totalorder %s15, 4
    %s25 = sphi 0, %s27
    %s28 = sphi 0, %s25
    %s29 = sphi 0, %s28
    %s45 = sphi 0, %s29
    %s49 = sphi 0, %s49
    %s51 = sphi 0, %s49
    %s52 = sphi 0, %s51
    %s66 = sphi 0, %s52
    %s70 = sphi 0, %s70
    %s72 = sphi 0, %s70
    %s73 = sphi 0, %s72
    %s87 = sphi 0, %s73
    %s91 = sphi 0, %s91
    %s93 = sphi 0, %s91
    %s94 = sphi 0, %s93
    %s108 = sphi 0, %s94
    %s112 = sphi 0, %s112
    %s114 = sphi 0, %s112
    %s115 = sphi 0, %s114
    %s129 = sphi 0, %s115
    %s133 = sphi 0, %s133
    %s135 = sphi 0, %s133
    %s136 = sphi 0, %s135
    %s150 = sphi 0, %s136
    %s154 = sphi 0, %s154
    %s156 = sphi 0, %s154
    %s157 = sphi 0, %s156
    %s171 = sphi 0, %s157
    %s175 = sphi 0, %s175
    %s177 = sphi 0, %s175
    %s178 = sphi 0, %s177
    %s192 = sphi 0, %s178
    %s196 = sphi 0, %s196
    %s198 = sphi 0, %s196
    %s199 = sphi 0, %s198
    %s213 = sphi 0, %s199
    %s219 = sphi 0, %s221
    %s222 = sphi 0, %s219
    %s223 = sphi 0, %s222
    %s239 = sphi 0, %s223
  $region4: #{attn_and_ff_forward.1} parent=0 // loop_header_branch
    %18 = sbr.rel (%p16) target = $region8
  $region5: #{attn_and_ff_forward.1} parent=0 // loop_body
    %s20 = ssub.s32 %s15, 1
    %s21 = ssub.s32 %s15, 2
    %s22 = sadd.s32 %s15, 1
    %s23 = ssub.s32 %s15, %s22
    %p24 = scmp.eq.s32.totalorder %s23, 0
    %s26 = sadd.s32 %s25, 1
    %s27 = scalar_select %p24, %s25, %s26
    %p30 = pneg %p24
    %p31 = scmp.eq.s32.totalorder %s15, 1
    %p32 = por %p30, %p31
    %p33 = scmp.ne.s32.totalorder %s25, %s28
    %p34 = scmp.eq.s32.totalorder %s15, 0
    %p35 = por %p33, %p34
    %p36 = scmp.ne.s32.totalorder %s25, %s28
    %p37 = scmp.eq.s32.totalorder %s20, 1
    %p38 = por %p36, %p37
    %p39 = scmp.ne.s32.totalorder %s28, %s29
    %p40 = scmp.eq.s32.totalorder %s20, 0
    %p41 = por %p39, %p40
    %p42 = scmp.ne.s32.totalorder %s28, %s29
    %p43 = scmp.eq.s32.totalorder %s21, 1
    %p44 = por %p42, %p43
    %p46 = scmp.ne.s32.totalorder %s29, %s45
    %p47 = scmp.eq.s32.totalorder %s21, 0
    %p48 = por %p46, %p47
    %s50 = sadd.s32 %s49, 1
    %p53 = scmp.eq.s32.totalorder %s15, 1
    %p54 = scmp.ne.s32.totalorder %s49, %s51
    %p55 = scmp.eq.s32.totalorder %s15, 0
    %p56 = por %p54, %p55
    %p57 = scmp.ne.s32.totalorder %s49, %s51
    %p58 = scmp.eq.s32.totalorder %s20, 1
    %p59 = por %p57, %p58
    %p60 = scmp.ne.s32.totalorder %s51, %s52
    %p61 = scmp.eq.s32.totalorder %s20, 0
    %p62 = por %p60, %p61
    %p63 = scmp.ne.s32.totalorder %s51, %s52
    %p64 = scmp.eq.s32.totalorder %s21, 1
    %p65 = por %p63, %p64
    %p67 = scmp.ne.s32.totalorder %s52, %s66
    %p68 = scmp.eq.s32.totalorder %s21, 0
    %p69 = por %p67, %p68
    %s71 = sadd.s32 %s70, 1
    %p74 = scmp.eq.s32.totalorder %s15, 1
    %p75 = scmp.ne.s32.totalorder %s70, %s72
    %p76 = scmp.eq.s32.totalorder %s15, 0
    %p77 = por %p75, %p76
    %p78 = scmp.ne.s32.totalorder %s70, %s72
    %p79 = scmp.eq.s32.totalorder %s20, 1
    %p80 = por %p78, %p79
    %p81 = scmp.ne.s32.totalorder %s72, %s73
    %p82 = scmp.eq.s32.totalorder %s20, 0
    %p83 = por %p81, %p82
    %p84 = scmp.ne.s32.totalorder %s72, %s73
    %p85 = scmp.eq.s32.totalorder %s21, 1
    %p86 = por %p84, %p85
    %p88 = scmp.ne.s32.totalorder %s73, %s87
    %p89 = scmp.eq.s32.totalorder %s21, 0
    %p90 = por %p88, %p89
    %s92 = sadd.s32 %s91, 1
    %p95 = scmp.eq.s32.totalorder %s15, 1
    %p96 = scmp.ne.s32.totalorder %s91, %s93
    %p97 = scmp.eq.s32.totalorder %s15, 0
    %p98 = por %p96, %p97
    %p99 = scmp.ne.s32.totalorder %s91, %s93
    %p100 = scmp.eq.s32.totalorder %s20, 1
    %p101 = por %p99, %p100
    %p102 = scmp.ne.s32.totalorder %s93, %s94
    %p103 = scmp.eq.s32.totalorder %s20, 0
    %p104 = por %p102, %p103
    %p105 = scmp.ne.s32.totalorder %s93, %s94
    %p106 = scmp.eq.s32.totalorder %s21, 1
    %p107 = por %p105, %p106
    %p109 = scmp.ne.s32.totalorder %s94, %s108
    %p110 = scmp.eq.s32.totalorder %s21, 0
    %p111 = por %p109, %p110
    %s113 = sadd.s32 %s112, 1
    %p116 = scmp.eq.s32.totalorder %s15, 1
    %p117 = scmp.ne.s32.totalorder %s112, %s114
    %p118 = scmp.eq.s32.totalorder %s15, 0
    %p119 = por %p117, %p118
    %p120 = scmp.ne.s32.totalorder %s112, %s114
    %p121 = scmp.eq.s32.totalorder %s20, 1
    %p122 = por %p120, %p121
    %p123 = scmp.ne.s32.totalorder %s114, %s115
    %p124 = scmp.eq.s32.totalorder %s20, 0
    %p125 = por %p123, %p124
    %p126 = scmp.ne.s32.totalorder %s114, %s115
    %p127 = scmp.eq.s32.totalorder %s21, 1
    %p128 = por %p126, %p127
    %p130 = scmp.ne.s32.totalorder %s115, %s129
    %p131 = scmp.eq.s32.totalorder %s21, 0
    %p132 = por %p130, %p131
    %s134 = sadd.s32 %s133, 1
    %p137 = scmp.eq.s32.totalorder %s15, 1
    %p138 = scmp.ne.s32.totalorder %s133, %s135
    %p139 = scmp.eq.s32.totalorder %s15, 0
    %p140 = por %p138, %p139
    %p141 = scmp.ne.s32.totalorder %s133, %s135
    %p142 = scmp.eq.s32.totalorder %s20, 1
    %p143 = por %p141, %p142
    %p144 = scmp.ne.s32.totalorder %s135, %s136
    %p145 = scmp.eq.s32.totalorder %s20, 0
    %p146 = por %p144, %p145
    %p147 = scmp.ne.s32.totalorder %s135, %s136
    %p148 = scmp.eq.s32.totalorder %s21, 1
    %p149 = por %p147, %p148
    %p151 = scmp.ne.s32.totalorder %s136, %s150
    %p152 = scmp.eq.s32.totalorder %s21, 0
    %p153 = por %p151, %p152
    %s155 = sadd.s32 %s154, 1
    %p158 = scmp.eq.s32.totalorder %s15, 1
    %p159 = scmp.ne.s32.totalorder %s154, %s156
    %p160 = scmp.eq.s32.totalorder %s15, 0
    %p161 = por %p159, %p160
    %p162 = scmp.ne.s32.totalorder %s154, %s156
    %p163 = scmp.eq.s32.totalorder %s20, 1
    %p164 = por %p162, %p163
    %p165 = scmp.ne.s32.totalorder %s156, %s157
    %p166 = scmp.eq.s32.totalorder %s20, 0
    %p167 = por %p165, %p166
    %p168 = scmp.ne.s32.totalorder %s156, %s157
    %p169 = scmp.eq.s32.totalorder %s21, 1
    %p170 = por %p168, %p169
    %p172 = scmp.ne.s32.totalorder %s157, %s171
    %p173 = scmp.eq.s32.totalorder %s21, 0
    %p174 = por %p172, %p173
    %s176 = sadd.s32 %s175, 1
    %p179 = scmp.eq.s32.totalorder %s15, 1
    %p180 = scmp.ne.s32.totalorder %s175, %s177
    %p181 = scmp.eq.s32.totalorder %s15, 0
    %p182 = por %p180, %p181
    %p183 = scmp.ne.s32.totalorder %s175, %s177
    %p184 = scmp.eq.s32.totalorder %s20, 1
    %p185 = por %p183, %p184
    %p186 = scmp.ne.s32.totalorder %s177, %s178
    %p187 = scmp.eq.s32.totalorder %s20, 0
    %p188 = por %p186, %p187
    %p189 = scmp.ne.s32.totalorder %s177, %s178
    %p190 = scmp.eq.s32.totalorder %s21, 1
    %p191 = por %p189, %p190
    %p193 = scmp.ne.s32.totalorder %s178, %s192
    %p194 = scmp.eq.s32.totalorder %s21, 0
    %p195 = por %p193, %p194
    %s197 = sadd.s32 %s196, 1
    %p200 = scmp.eq.s32.totalorder %s15, 1
    %p201 = scmp.ne.s32.totalorder %s196, %s198
    %p202 = scmp.eq.s32.totalorder %s15, 0
    %p203 = por %p201, %p202
    %p204 = scmp.ne.s32.totalorder %s196, %s198
    %p205 = scmp.eq.s32.totalorder %s20, 1
    %p206 = por %p204, %p205
    %p207 = scmp.ne.s32.totalorder %s198, %s199
    %p208 = scmp.eq.s32.totalorder %s20, 0
    %p209 = por %p207, %p208
    %p210 = scmp.ne.s32.totalorder %s198, %s199
    %p211 = scmp.eq.s32.totalorder %s21, 1
    %p212 = por %p210, %p211
    %p214 = scmp.ne.s32.totalorder %s199, %s213
    %p215 = scmp.eq.s32.totalorder %s21, 0
    %p216 = por %p214, %p215
    %s217 = ssub.s32 %s15, %s22
    %p218 = scmp.eq.s32.totalorder %s217, 0
    %s220 = sadd.s32 %s219, 1
    %s221 = scalar_select %p218, %s219, %s220
    %p224 = pneg %p218
    %p225 = scmp.eq.s32.totalorder %s15, 1
    %p226 = por %p224, %p225
    %p227 = scmp.ne.s32.totalorder %s219, %s222
    %p228 = scmp.eq.s32.totalorder %s15, 0
    %p229 = por %p227, %p228
    %p230 = scmp.ne.s32.totalorder %s219, %s222
    %p231 = scmp.eq.s32.totalorder %s20, 1
    %p232 = por %p230, %p231
    %p233 = scmp.ne.s32.totalorder %s222, %s223
    %p234 = scmp.eq.s32.totalorder %s20, 0
    %p235 = por %p233, %p234
    %p236 = scmp.ne.s32.totalorder %s222, %s223
    %p237 = scmp.eq.s32.totalorder %s21, 1
    %p238 = por %p236, %p237
    %p240 = scmp.ne.s32.totalorder %s223, %s239
    %p241 = scmp.eq.s32.totalorder %s21, 0
    %p242 = por %p240, %p241
    %p243 = scmp.le.s32.totalorder 1, %s15
    %p244 = scmp.lt.s32.totalorder %s15, 3
    %p245 = pnand %p243, %p244
    %p246 = pneg %p245
    // Predicated region
    $region9: #{attn_and_ff_forward.1} parent=5 // pred_check
      _
    $region10: #{attn_and_ff_forward.1} parent=5 // pred_check_branch
      %248 = sbr.rel (%p245) target = $region12
    $region11: #{attn_and_ff_forward.1} parent=5 // pred_region
      %s249 = ssub.s32 %s15, 1
      // Predicated region
      $region13: #{attn_and_ff_forward.1} parent=11 // pred_check
        %p250 = pneg %p62
      $region14: #{attn_and_ff_forward.1} parent=11 // pred_check_branch
        %252 = sbr.rel (%p250) target = $region16
      $region15: #{attn_and_ff_forward.1} parent=11 // pred_region
        _
      $region16: #{attn_and_ff_forward.1} parent=11 // pred_fallthru
        _
      // Predicated region
      $region17: #{attn_and_ff_forward.1} parent=11 // pred_check
        %p253 = pneg %p83
      $region18: #{attn_and_ff_forward.1} parent=11 // pred_check_branch
        %255 = sbr.rel (%p253) target = $region20
      $region19: #{attn_and_ff_forward.1} parent=11 // pred_region
        _
      $region20: #{attn_and_ff_forward.1} parent=11 // pred_fallthru
        _
      // Predicated region
      $region21: #{attn_and_ff_forward.1} parent=11 // pred_check
        %p256 = pneg %p104
      $region22: #{attn_and_ff_forward.1} parent=11 // pred_check_branch
        %258 = sbr.rel (%p256) target = $region24
      $region23: #{attn_and_ff_forward.1} parent=11 // pred_region
        _
      $region24: #{attn_and_ff_forward.1} parent=11 // pred_fallthru
        _
      // Predicated region
      $region25: #{attn_and_ff_forward.1} parent=11 // pred_check
        %p259 = pneg %p125
      $region26: #{attn_and_ff_forward.1} parent=11 // pred_check_branch
        %261 = sbr.rel (%p259) target = $region28
      $region27: #{attn_and_ff_forward.1} parent=11 // pred_region
        _
      $region28: #{attn_and_ff_forward.1} parent=11 // pred_fallthru
        _
      // Predicated region
      $region29: #{attn_and_ff_forward.1} parent=11 // pred_check
        %p262 = pneg %p146
      $region30: #{attn_and_ff_forward.1} parent=11 // pred_check_branch
        %264 = sbr.rel (%p262) target = $region32
      $region31: #{attn_and_ff_forward.1} parent=11 // pred_region
        _
      $region32: #{attn_and_ff_forward.1} parent=11 // pred_fallthru
        _
      // Predicated region
      $region33: #{attn_and_ff_forward.1} parent=11 // pred_check
        %p265 = pneg %p167
      $region34: #{attn_and_ff_forward.1} parent=11 // pred_check_branch
        %267 = sbr.rel (%p265) target = $region36
      $region35: #{attn_and_ff_forward.1} parent=11 // pred_region
        _
      $region36: #{attn_and_ff_forward.1} parent=11 // pred_fallthru
        _
      // Predicated region
      $region37: #{attn_and_ff_forward.1} parent=11 // pred_check
        %p268 = pneg %p188
      $region38: #{attn_and_ff_forward.1} parent=11 // pred_check_branch
        %270 = sbr.rel (%p268) target = $region40
      $region39: #{attn_and_ff_forward.1} parent=11 // pred_region
        _
      $region40: #{attn_and_ff_forward.1} parent=11 // pred_fallthru
        _
      // Predicated region
      $region41: #{attn_and_ff_forward.1} parent=11 // pred_check
        %p271 = pneg %p209
      $region42: #{attn_and_ff_forward.1} parent=11 // pred_check_branch
        %273 = sbr.rel (%p271) target = $region44
      $region43: #{attn_and_ff_forward.1} parent=11 // pred_region
        _
      $region44: #{attn_and_ff_forward.1} parent=11 // pred_fallthru
        _
    $region12: #{attn_and_ff_forward.1} parent=5 // pred_fallthru
      _
    %p274 = scmp.lt.s32.totalorder %s15, 2
    // Predicated region
    $region45: #{attn_and_ff_forward.1} parent=5 // pred_check
      %p275 = pneg %p274
    $region46: #{attn_and_ff_forward.1} parent=5 // pred_check_branch
      %277 = sbr.rel (%p275) target = $region48
    $region47: #{attn_and_ff_forward.1} parent=5 // pred_region
      // Predicated region
      $region49: #{attn_and_ff_forward.1} parent=47 // pred_check
        %p278 = pneg %p35
      $region50: #{attn_and_ff_forward.1} parent=47 // pred_check_branch
        %280 = sbr.rel (%p278) target = $region52
      $region51: #{attn_and_ff_forward.1} parent=47 // pred_region
        %s281 = smul.u32 4, %s15
        %p282 = scmp.lt.s32.totalorder %s281, 7
        %s283 = scalar_select %p282, %s281, 7
        %s284 = smul.addr %s283, 4
        %s285 = scalar_lea.vmem %s0, %s284
        %s286 = smul.u32 4, %s15
      $region52: #{attn_and_ff_forward.1} parent=47 // pred_fallthru
        _
    $region48: #{attn_and_ff_forward.1} parent=5 // pred_fallthru
      _
    %p287 = scmp.le.s32.totalorder 1, %s15
    %p288 = scmp.lt.s32.totalorder %s15, 3
    %p289 = pnand %p287, %p288
    %p290 = pneg %p289
    // Predicated region
    $region53: #{attn_and_ff_forward.1} parent=5 // pred_check
      _
    $region54: #{attn_and_ff_forward.1} parent=5 // pred_check_branch
      %292 = sbr.rel (%p289) target = $region56
    $region55: #{attn_and_ff_forward.1} parent=5 // pred_region
      %s293 = ssub.s32 %s15, 1
      %s294 = smul.u32 4, %s20
      %p295 = scmp.lt.s32.totalorder %s294, 7
      %s296 = scalar_select %p295, %s294, 7
      %s297 = smul.addr %s296, 4
      %s298 = scalar_lea.vmem %s0, %s297
      %p299 = pneg %p41
      %p300 = pneg %p38
      %p301 = pneg %p62
      %p302 = pneg %p59
      %p303 = pneg %p83
      %p304 = pneg %p80
      %p305 = pneg %p104
      %p306 = pneg %p101
      %p307 = pneg %p125
      %p308 = pneg %p122
      %p309 = pneg %p146
      %p310 = pneg %p143
      %p311 = pneg %p167
      %p312 = pneg %p164
      %p313 = pneg %p188
      %p314 = pneg %p185
      %p315 = pneg %p209
      %p316 = pneg %p206
      %p317 = pneg %p235
      %p318 = pneg %p232
      %s319 = smul.u32 4, %s20
      %p320 = scmp.lt.s32.totalorder %s319, 7
      %s321 = scalar_select %p320, %s319, 7
      %s322 = smul.addr %s321, 4
      %s323 = scalar_lea.vmem %s9, %s322
      %s324 = smul.u32 4, %s20
      %p325 = scmp.lt.s32.totalorder %s324, 7
      %s326 = scalar_select %p325, %s324, 7
      %s327 = smul.addr %s326, 4
      %s328 = scalar_lea.vmem %s0, %s327
      %s329 = smul.u32 4, %s20
      %s330 = smul.u32 4, %s20
      %p331 = scmp.lt.s32.totalorder %s330, 7
      %s332 = scalar_select %p331, %s330, 7
      %s333 = smul.addr %s332, 4
      %s334 = scalar_lea.vmem %s9, %s333
      %s335 = smul.u32 4, %s20
      %v337 = vld [vmem:[%s328] sm:$0xff]
      %v338 = vld [vmem:[%s328 + $0x8] sm:$0xff]
      %v341 = vcombine.high %v337, %v337
      %v342 = vcombine.high %v338, %v338
      %v345 = vpack.c.bf16 %v337, %v337
      %v346 = vpack.c.bf16 %v341, %v341
      %v347 = vpack.c.bf16 %v338, %v338
      %v348 = vpack.c.bf16 %v342, %v342
      %v349 = vld [vmem:[%s1] sm:$0xf]
      %v350 = vld [vmem:[%s1 + $0x4] sm:$0xf]
      %v351 = vld [vmem:[%s1 + $0x8] sm:$0xf]
      %v352 = vld [vmem:[%s1 + $0xc] sm:$0xf]
      %v353 = vld [vmem:[%s1 + $0x10] sm:$0xf]
      %v354 = vld [vmem:[%s1 + $0x14] sm:$0xf]
      %v355 = vld [vmem:[%s1 + $0x18] sm:$0xf]
      %v356 = vld [vmem:[%s1 + $0x1c] sm:$0xf]
      %v357 = vld [vmem:[%s1 + $0x20] sm:$0xf]
      %v358 = vld [vmem:[%s1 + $0x24] sm:$0xf]
      %v359 = vld [vmem:[%s1 + $0x28] sm:$0xf]
      %v360 = vld [vmem:[%s1 + $0x2c] sm:$0xf]
      %v361 = vld [vmem:[%s1 + $0x30] sm:$0xf]
      %v362 = vld [vmem:[%s1 + $0x34] sm:$0xf]
      %v363 = vld [vmem:[%s1 + $0x38] sm:$0xf]
      %v364 = vld [vmem:[%s1 + $0x3c] sm:$0xf]
      %v365 = vld [vmem:[%s1 + $0x40] sm:$0xf]
      %v366 = vld [vmem:[%s1 + $0x44] sm:$0xf]
      %v367 = vld [vmem:[%s1 + $0x48] sm:$0xf]
      %v368 = vld [vmem:[%s1 + $0x4c] sm:$0xf]
      %v369 = vld [vmem:[%s1 + $0x50] sm:$0xf]
      %v370 = vld [vmem:[%s1 + $0x54] sm:$0xf]
      %v371 = vld [vmem:[%s1 + $0x58] sm:$0xf]
      %v372 = vld [vmem:[%s1 + $0x5c] sm:$0xf]
      %v373 = vld [vmem:[%s2] sm:$0xff]
      %v374 = vld [vmem:[%s2 + $0x8] sm:$0xff]
      %v375 = vld [vmem:[%s2 + $0x10] sm:$0xff]
      %v376 = vld [vmem:[%s2 + $0x18] sm:$0xff]
      %v377 = vld [vmem:[%s2 + $0x20] sm:$0xff]
      %v378 = vld [vmem:[%s2 + $0x28] sm:$0xff]
      %v379 = vld [vmem:[%s2 + $0x30] sm:$0xff]
      %v380 = vld [vmem:[%s2 + $0x38] sm:$0xff]
      %v381 = vld [vmem:[%s2 + $0x40] sm:$0xff]
      %v382 = vld [vmem:[%s2 + $0x48] sm:$0xff]
      %v383 = vld [vmem:[%s2 + $0x50] sm:$0xff]
      %v384 = vld [vmem:[%s2 + $0x58] sm:$0xff]
      %v385 = vld [vmem:[%s2 + $0x60] sm:$0xff]
      %v386 = vld [vmem:[%s2 + $0x68] sm:$0xff]
      %v387 = vld [vmem:[%s2 + $0x70] sm:$0xff]
      %v388 = vld [vmem:[%s2 + $0x78] sm:$0xff]
      %v389 = vld [vmem:[%s2 + $0x80] sm:$0xff]
      %v390 = vld [vmem:[%s2 + $0x88] sm:$0xff]
      %v391 = vld [vmem:[%s2 + $0x90] sm:$0xff]
      %v392 = vld [vmem:[%s2 + $0x98] sm:$0xff]
      %v393 = vld [vmem:[%s2 + $0xa0] sm:$0xff]
      %v394 = vld [vmem:[%s2 + $0xa8] sm:$0xff]
      %v395 = vld [vmem:[%s2 + $0xb0] sm:$0xff]
      %v396 = vld [vmem:[%s2 + $0xb8] sm:$0xff]
      %398 = vset.pattern.permute.xlu0 0
      %399 = vperm.xlu0 %398, %v373
      %v400 = vpop.permute.xlu0 %399
      %403 = vset.pattern.permute.xlu0 0
      %404 = vperm.xlu0 %403, %v374
      %v405 = vpop.permute.xlu0 %404
      %408 = vset.pattern.permute.xlu0 0
      %409 = vperm.xlu0 %408, %v375
      %v410 = vpop.permute.xlu0 %409
      %413 = vset.pattern.permute.xlu0 0
      %414 = vperm.xlu0 %413, %v376
      %v415 = vpop.permute.xlu0 %414
      %418 = vset.pattern.permute.xlu0 0
      %419 = vperm.xlu0 %418, %v377
      %v420 = vpop.permute.xlu0 %419
      %423 = vset.pattern.permute.xlu0 0
      %424 = vperm.xlu0 %423, %v378
      %v425 = vpop.permute.xlu0 %424
      %428 = vset.pattern.permute.xlu0 0
      %429 = vperm.xlu0 %428, %v379
      %v430 = vpop.permute.xlu0 %429
      %433 = vset.pattern.permute.xlu0 0
      %434 = vperm.xlu0 %433, %v380
      %v435 = vpop.permute.xlu0 %434
      %438 = vset.pattern.permute.xlu0 0
      %439 = vperm.xlu0 %438, %v381
      %v440 = vpop.permute.xlu0 %439
      %443 = vset.pattern.permute.xlu0 0
      %444 = vperm.xlu0 %443, %v382
      %v445 = vpop.permute.xlu0 %444
      %448 = vset.pattern.permute.xlu0 0
      %449 = vperm.xlu0 %448, %v383
      %v450 = vpop.permute.xlu0 %449
      %453 = vset.pattern.permute.xlu0 0
      %454 = vperm.xlu0 %453, %v384
      %v455 = vpop.permute.xlu0 %454
      %458 = vset.pattern.permute.xlu0 0
      %459 = vperm.xlu0 %458, %v385
      %v460 = vpop.permute.xlu0 %459
      %463 = vset.pattern.permute.xlu0 0
      %464 = vperm.xlu0 %463, %v386
      %v465 = vpop.permute.xlu0 %464
      %468 = vset.pattern.permute.xlu0 0
      %469 = vperm.xlu0 %468, %v387
      %v470 = vpop.permute.xlu0 %469
      %473 = vset.pattern.permute.xlu0 0
      %474 = vperm.xlu0 %473, %v388
      %v475 = vpop.permute.xlu0 %474
      %478 = vset.pattern.permute.xlu0 0
      %479 = vperm.xlu0 %478, %v389
      %v480 = vpop.permute.xlu0 %479
      %483 = vset.pattern.permute.xlu0 0
      %484 = vperm.xlu0 %483, %v390
      %v485 = vpop.permute.xlu0 %484
      %488 = vset.pattern.permute.xlu0 0
      %489 = vperm.xlu0 %488, %v391
      %v490 = vpop.permute.xlu0 %489
      %493 = vset.pattern.permute.xlu0 0
      %494 = vperm.xlu0 %493, %v392
      %v495 = vpop.permute.xlu0 %494
      %498 = vset.pattern.permute.xlu0 0
      %499 = vperm.xlu0 %498, %v393
      %v500 = vpop.permute.xlu0 %499
      %503 = vset.pattern.permute.xlu0 0
      %504 = vperm.xlu0 %503, %v394
      %v505 = vpop.permute.xlu0 %504
      %508 = vset.pattern.permute.xlu0 0
      %509 = vperm.xlu0 %508, %v395
      %v510 = vpop.permute.xlu0 %509
      %513 = vset.pattern.permute.xlu0 0
      %514 = vperm.xlu0 %513, %v396
      %v515 = vpop.permute.xlu0 %514
      %v541 = vunpack.c.l.b16 %v349
      %v542 = vunpack.c.l.b16 %v350
      %v543 = vunpack.c.l.b16 %v351
      %v544 = vunpack.c.l.b16 %v352
      %v545 = vunpack.c.l.b16 %v353
      %v546 = vunpack.c.l.b16 %v354
      %v547 = vunpack.c.l.b16 %v355
      %v548 = vunpack.c.l.b16 %v356
      %v549 = vunpack.c.l.b16 %v357
      %v550 = vunpack.c.l.b16 %v358
      %v551 = vunpack.c.l.b16 %v359
      %v552 = vunpack.c.l.b16 %v360
      %v553 = vunpack.c.l.b16 %v361
      %v554 = vunpack.c.l.b16 %v362
      %v555 = vunpack.c.l.b16 %v363
      %v556 = vunpack.c.l.b16 %v364
      %v557 = vunpack.c.l.b16 %v365
      %v558 = vunpack.c.l.b16 %v366
      %v559 = vunpack.c.l.b16 %v367
      %v560 = vunpack.c.l.b16 %v368
      %v561 = vunpack.c.l.b16 %v369
      %v562 = vunpack.c.l.b16 %v370
      %v563 = vunpack.c.l.b16 %v371
      %v564 = vunpack.c.l.b16 %v372
      %v565 = vpack.c.b16 %v542, %v541
      %v566 = vpack.c.b16 %v544, %v543
      %v567 = vpack.c.b16 %v546, %v545
      %v568 = vpack.c.b16 %v548, %v547
      %v569 = vpack.c.b16 %v550, %v549
      %v570 = vpack.c.b16 %v552, %v551
      %v571 = vpack.c.b16 %v554, %v553
      %v572 = vpack.c.b16 %v556, %v555
      %v573 = vpack.c.b16 %v558, %v557
      %v574 = vpack.c.b16 %v560, %v559
      %v575 = vpack.c.b16 %v562, %v561
      %v576 = vpack.c.b16 %v564, %v563
      %vm577 = vcmask 31744
      %v579 = vsel %vm577, %v565, 0
      %v582 = vsel %vm577, %v566, 0
      %v585 = vsel %vm577, %v567, 0
      %v588 = vsel %vm577, %v568, 0
      %v591 = vsel %vm577, %v569, 0
      %v594 = vsel %vm577, %v570, 0
      %v597 = vsel %vm577, %v571, 0
      %v600 = vsel %vm577, %v572, 0
      %v603 = vsel %vm577, %v573, 0
      %v606 = vsel %vm577, %v574, 0
      %v609 = vsel %vm577, %v575, 0
      %v612 = vsel %vm577, %v576, 0
      %vm614 = vcmask 1041408
      %v616 = vsel %vm614, %v345, 0
      %v619 = vsel %vm614, %v346, 0
      %v622 = vsel %vm614, %v347, 0
      %v625 = vsel %vm614, %v348, 0
      %627 = vmatprep.subr.bf16.mxu0 %v619
      %628 = vmatpush1.bf16.msra.mxu0 %v616
      %629 = vmatprep.subr.bf16.mxu0 0
      %630 = vmatpush1.bf16.msra.mxu0 0
      %631 = vmatprep.subr.bf16.mxu0 0
      %632 = vmatpush1.bf16.msra.mxu0 0
      %633 = vmatprep.subr.bf16.mxu0 0
      %634 = vmatpush1.bf16.msra.mxu0 0
      %635 = vmatprep.subr.bf16.mxu0 0
      %636 = vmatpush1.bf16.msra.mxu0 0
      %637 = vmatprep.subr.bf16.mxu0 0
      %638 = vmatpush1.bf16.msra.mxu0 0
      %639 = vmatprep.subr.bf16.mxu0 0
      %640 = vmatpush1.bf16.msra.mxu0 0
      %641 = vmatprep.subr.bf16.mxu0 0
      %642 = vmatpush1.bf16.msra.mxu0 0
      %643 = vmatprep.subr.bf16.mxu0 0
      %644 = vmatpush1.bf16.msra.mxu0 0
      %645 = vmatprep.subr.bf16.mxu0 0
      %646 = vmatpush1.bf16.msra.mxu0 0
      %647 = vmatprep.subr.bf16.mxu0 0
      %648 = vmatpush1.bf16.msra.mxu0 0
      %649 = vmatprep.subr.bf16.mxu0 0
      %650 = vmatpush1.bf16.msra.mxu0 0
      %651 = vmatprep.subr.bf16.mxu0 0
      %652 = vmatpush1.bf16.msra.mxu0 0
      %653 = vmatprep.subr.bf16.mxu0 0
      %654 = vmatpush1.bf16.msra.mxu0 0
      %655 = vmatprep.subr.bf16.mxu0 0
      %656 = vmatpush1.bf16.msra.mxu0 0
      %657 = vmatprep.subr.bf16.mxu0 0
      %658 = vmatpush1.bf16.msra.mxu0 0
      %659 = vmatprep.mubr.bf16.mxu0 0
      %660 = vmatmul.mubr.bf16.gmra.mrb[0].mxu0 %v579
      %v661 = vpop.f32.mrb[0].mxu0
      %v662 = vadd.f32 %v400, %v661
      %v663 = vpop.f32.mrb[0].mxu0
      %v664 = vadd.f32 %v400, %v663
      %v665 = vpop.f32.mrb[0].mxu0
      %v666 = vadd.f32 %v405, %v665
      %v667 = vpop.f32.mrb[0].mxu0
      %v668 = vadd.f32 %v405, %v667
      %669 = vmatprep.mubr.bf16.mxu0 0
      %670 = vmatmul.mubr.bf16.gmra.mrb[0].mxu0 %v582
      %v671 = vpop.f32.mrb[0].mxu0
      %v672 = vadd.f32 %v410, %v671
      %v673 = vpop.f32.mrb[0].mxu0
      %v674 = vadd.f32 %v410, %v673
      %v675 = vpop.f32.mrb[0].mxu0
      %v676 = vadd.f32 %v415, %v675
      %v677 = vpop.f32.mrb[0].mxu0
      %v678 = vadd.f32 %v415, %v677
      %679 = vmatprep.mubr.bf16.mxu0 0
      %680 = vmatmul.mubr.bf16.gmra.mrb[0].mxu0 %v585
      %v681 = vpop.f32.mrb[0].mxu0
      %v682 = vadd.f32 %v420, %v681
      %v683 = vpop.f32.mrb[0].mxu0
      %v684 = vadd.f32 %v420, %v683
      %v685 = vpop.f32.mrb[0].mxu0
      %v686 = vadd.f32 %v425, %v685
      %v687 = vpop.f32.mrb[0].mxu0
      %v688 = vadd.f32 %v425, %v687
      %689 = vmatprep.mubr.bf16.mxu0 0
      %690 = vmatmul.mubr.bf16.gmra.mrb[0].mxu0 %v588
      %v691 = vpop.f32.mrb[0].mxu0
      %v692 = vadd.f32 %v430, %v691
      %v693 = vpop.f32.mrb[0].mxu0
      %v694 = vadd.f32 %v430, %v693
      %v695 = vpop.f32.mrb[0].mxu0
      %v696 = vadd.f32 %v435, %v695
      %v697 = vpop.f32.mrb[0].mxu0
      %v698 = vadd.f32 %v435, %v697
      %699 = vmatprep.mubr.bf16.mxu0 0
      %700 = vmatmul.mubr.bf16.gmra.mrb[0].mxu0 %v591
      %v701 = vpop.f32.mrb[0].mxu0
      %v702 = vadd.f32 %v440, %v701
      %v703 = vpop.f32.mrb[0].mxu0
      %v704 = vadd.f32 %v440, %v703
      %v705 = vpop.f32.mrb[0].mxu0
      %v706 = vadd.f32 %v445, %v705
      %v707 = vpop.f32.mrb[0].mxu0
      %v708 = vadd.f32 %v445, %v707
      %709 = vmatprep.mubr.bf16.mxu0 0
      %710 = vmatmul.mubr.bf16.gmra.mrb[0].mxu0 %v594
      %v711 = vpop.f32.mrb[0].mxu0
      %v712 = vadd.f32 %v450, %v711
      %v713 = vpop.f32.mrb[0].mxu0
      %v714 = vadd.f32 %v450, %v713
      %v715 = vpop.f32.mrb[0].mxu0
      %v716 = vadd.f32 %v455, %v715
      %v717 = vpop.f32.mrb[0].mxu0
      %v718 = vadd.f32 %v455, %v717
      %719 = vmatprep.mubr.bf16.mxu0 0
      %720 = vmatmul.mubr.bf16.gmra.mrb[0].mxu0 %v597
      %v721 = vpop.f32.mrb[0].mxu0
      %v722 = vadd.f32 %v460, %v721
      %v723 = vpop.f32.mrb[0].mxu0
      %v724 = vadd.f32 %v460, %v723
      %v725 = vpop.f32.mrb[0].mxu0
      %v726 = vadd.f32 %v465, %v725
      %v727 = vpop.f32.mrb[0].mxu0
      %v728 = vadd.f32 %v465, %v727
      %729 = vmatprep.mubr.bf16.mxu0 0
      %730 = vmatmul.mubr.bf16.gmra.mrb[0].mxu0 %v600
      %v731 = vpop.f32.mrb[0].mxu0
      %v732 = vadd.f32 %v470, %v731
      %v733 = vpop.f32.mrb[0].mxu0
      %v734 = vadd.f32 %v470, %v733
      %v735 = vpop.f32.mrb[0].mxu0
      %v736 = vadd.f32 %v475, %v735
      %v737 = vpop.f32.mrb[0].mxu0
      %v738 = vadd.f32 %v475, %v737
      %739 = vmatprep.mubr.bf16.mxu0 0
      %740 = vmatmul.mubr.bf16.gmra.mrb[0].mxu0 %v603
      %v741 = vpop.f32.mrb[0].mxu0
      %v742 = vadd.f32 %v480, %v741
      %v743 = vpop.f32.mrb[0].mxu0
      %v744 = vadd.f32 %v480, %v743
      %v745 = vpop.f32.mrb[0].mxu0
      %v746 = vadd.f32 %v485, %v745
      %v747 = vpop.f32.mrb[0].mxu0
      %v748 = vadd.f32 %v485, %v747
      %749 = vmatprep.mubr.bf16.mxu0 0
      %750 = vmatmul.mubr.bf16.gmra.mrb[0].mxu0 %v606
      %v751 = vpop.f32.mrb[0].mxu0
      %v752 = vadd.f32 %v490, %v751
      %v753 = vpop.f32.mrb[0].mxu0
      %v754 = vadd.f32 %v490, %v753
      %v755 = vpop.f32.mrb[0].mxu0
      %v756 = vadd.f32 %v495, %v755
      %v757 = vpop.f32.mrb[0].mxu0
      %v758 = vadd.f32 %v495, %v757
      %759 = vmatprep.mubr.bf16.mxu0 0
      %760 = vmatmul.mubr.bf16.gmra.mrb[0].mxu0 %v609
      %v761 = vpop.f32.mrb[0].mxu0
      %v762 = vadd.f32 %v500, %v761
      %v763 = vpop.f32.mrb[0].mxu0
      %v764 = vadd.f32 %v500, %v763
      %v765 = vpop.f32.mrb[0].mxu0
      %v766 = vadd.f32 %v505, %v765
      %v767 = vpop.f32.mrb[0].mxu0
      %v768 = vadd.f32 %v505, %v767
      %769 = vmatprep.mubr.bf16.mxu0 0
      %770 = vmatmul.mubr.bf16.gmra.mrb[0].mxu0 %v612
      %v771 = vpop.f32.mrb[0].mxu0
      %v772 = vadd.f32 %v510, %v771
      %v773 = vpop.f32.mrb[0].mxu0
      %v774 = vadd.f32 %v510, %v773
      %v775 = vpop.f32.mrb[0].mxu0
      %v776 = vadd.f32 %v515, %v775
      %v777 = vpop.f32.mrb[0].mxu0
      %v778 = vadd.f32 %v515, %v777
      %779 = vdwg.mxu0
      %780 = vmatprep.subr.bf16.mxu0 %v625
      %781 = vmatpush1.bf16.msra.mxu0 %v622
      %782 = vmatprep.subr.bf16.mxu0 0
      %783 = vmatpush1.bf16.msra.mxu0 0
      %784 = vmatprep.subr.bf16.mxu0 0
      %785 = vmatpush1.bf16.msra.mxu0 0
      %786 = vmatprep.subr.bf16.mxu0 0
      %787 = vmatpush1.bf16.msra.mxu0 0
      %788 = vmatprep.subr.bf16.mxu0 0
      %789 = vmatpush1.bf16.msra.mxu0 0
      %790 = vmatprep.subr.bf16.mxu0 0
      %791 = vmatpush1.bf16.msra.mxu0 0
      %792 = vmatprep.subr.bf16.mxu0 0
      %793 = vmatpush1.bf16.msra.mxu0 0
      %794 = vmatprep.subr.bf16.mxu0 0
      %795 = vmatpush1.bf16.msra.mxu0 0
      %796 = vmatprep.subr.bf16.mxu0 0
      %797 = vmatpush1.bf16.msra.mxu0 0
      %798 = vmatprep.subr.bf16.mxu0 0
      %799 = vmatpush1.bf16.msra.mxu0 0
      %800 = vmatprep.subr.bf16.mxu0 0
      %801 = vmatpush1.bf16.msra.mxu0 0
      %802 = vmatprep.subr.bf16.mxu0 0
      %803 = vmatpush1.bf16.msra.mxu0 0
      %804 = vmatprep.subr.bf16.mxu0 0
      %805 = vmatpush1.bf16.msra.mxu0 0
      %806 = vmatprep.subr.bf16.mxu0 0
      %807 = vmatpush1.bf16.msra.mxu0 0
      %808 = vmatprep.subr.bf16.mxu0 0
      %809 = vmatpush1.bf16.msra.mxu0 0
      %810 = vmatprep.subr.bf16.mxu0 0
      %811 = vmatpush1.bf16.msra.mxu0 0
      %812 = vmatprep.mubr.bf16.mxu0 0
      %813 = vmatmul.mubr.bf16.gmra.mrb[0].mxu0 %v579
      %v814 = vpop.f32.mrb[0].mxu0
      %v815 = vadd.f32 %v400, %v814
      %v816 = vpop.f32.mrb[0].mxu0
      %v817 = vadd.f32 %v400, %v816
      %v818 = vpop.f32.mrb[0].mxu0
      %v819 = vadd.f32 %v405, %v818
      %v820 = vpop.f32.mrb[0].mxu0
      %v821 = vadd.f32 %v405, %v820
      %822 = vmatprep.mubr.bf16.mxu0 0
      %823 = vmatmul.mubr.bf16.gmra.mrb[0].mxu0 %v582
      %v824 = vpop.f32.mrb[0].mxu0
      %v825 = vadd.f32 %v410, %v824
      %v826 = vpop.f32.mrb[0].mxu0
      %v827 = vadd.f32 %v410, %v826
      %v828 = vpop.f32.mrb[0].mxu0
      %v829 = vadd.f32 %v415, %v828
      %v830 = vpop.f32.mrb[0].mxu0
      %v831 = vadd.f32 %v415, %v830
      %832 = vmatprep.mubr.bf16.mxu0 0
      %833 = vmatmul.mubr.bf16.gmra.mrb[0].mxu0 %v585
      %v834 = vpop.f32.mrb[0].mxu0
      %v835 = vadd.f32 %v420, %v834
      %v836 = vpop.f32.mrb[0].mxu0
      %v837 = vadd.f32 %v420, %v836
      %v838 = vpop.f32.mrb[0].mxu0
      %v839 = vadd.f32 %v425, %v838
      %v840 = vpop.f32.mrb[0].mxu0
      %v841 = vadd.f32 %v425, %v840
      %842 = vmatprep.mubr.bf16.mxu0 0
      %843 = vmatmul.mubr.bf16.gmra.mrb[0].mxu0 %v588
      %v844 = vpop.f32.mrb[0].mxu0
      %v845 = vadd.f32 %v430, %v844
      %v846 = vpop.f32.mrb[0].mxu0
      %v847 = vadd.f32 %v430, %v846
      %v848 = vpop.f32.mrb[0].mxu0
      %v849 = vadd.f32 %v435, %v848
      %v850 = vpop.f32.mrb[0].mxu0
      %v851 = vadd.f32 %v435, %v850
      %852 = vmatprep.mubr.bf16.mxu0 0
      %853 = vmatmul.mubr.bf16.gmra.mrb[0].mxu0 %v591
      %v854 = vpop.f32.mrb[0].mxu0
      %v855 = vadd.f32 %v440, %v854
      %v856 = vpop.f32.mrb[0].mxu0
      %v857 = vadd.f32 %v440, %v856
      %v858 = vpop.f32.mrb[0].mxu0
      %v859 = vadd.f32 %v445, %v858
      %v860 = vpop.f32.mrb[0].mxu0
      %v861 = vadd.f32 %v445, %v860
      %862 = vmatprep.mubr.bf16.mxu0 0
      %863 = vmatmul.mubr.bf16.gmra.mrb[0].mxu0 %v594
      %v864 = vpop.f32.mrb[0].mxu0
      %v865 = vadd.f32 %v450, %v864
      %v866 = vpop.f32.mrb[0].mxu0
      %v867 = vadd.f32 %v450, %v866
      %v868 = vpop.f32.mrb[0].mxu0
      %v869 = vadd.f32 %v455, %v868
      %v870 = vpop.f32.mrb[0].mxu0
      %v871 = vadd.f32 %v455, %v870
      %872 = vmatprep.mubr.bf16.mxu0 0
      %873 = vmatmul.mubr.bf16.gmra.mrb[0].mxu0 %v597
      %v874 = vpop.f32.mrb[0].mxu0
      %v875 = vadd.f32 %v460, %v874
      %v876 = vpop.f32.mrb[0].mxu0
      %v877 = vadd.f32 %v460, %v876
      %v878 = vpop.f32.mrb[0].mxu0
      %v879 = vadd.f32 %v465, %v878
      %v880 = vpop.f32.mrb[0].mxu0
      %v881 = vadd.f32 %v465, %v880
      %882 = vmatprep.mubr.bf16.mxu0 0
      %883 = vmatmul.mubr.bf16.gmra.mrb[0].mxu0 %v600
      %v884 = vpop.f32.mrb[0].mxu0
      %v885 = vadd.f32 %v470, %v884
      %v886 = vpop.f32.mrb[0].mxu0
      %v887 = vadd.f32 %v470, %v886
      %v888 = vpop.f32.mrb[0].mxu0
      %v889 = vadd.f32 %v475, %v888
      %v890 = vpop.f32.mrb[0].mxu0
      %v891 = vadd.f32 %v475, %v890
      %892 = vmatprep.mubr.bf16.mxu0 0
      %893 = vmatmul.mubr.bf16.gmra.mrb[0].mxu0 %v603
      %v894 = vpop.f32.mrb[0].mxu0
      %v895 = vadd.f32 %v480, %v894
      %v896 = vpop.f32.mrb[0].mxu0
      %v897 = vadd.f32 %v480, %v896
      %v898 = vpop.f32.mrb[0].mxu0
      %v899 = vadd.f32 %v485, %v898
      %v900 = vpop.f32.mrb[0].mxu0
      %v901 = vadd.f32 %v485, %v900
      %902 = vmatprep.mubr.bf16.mxu0 0
      %903 = vmatmul.mubr.bf16.gmra.mrb[0].mxu0 %v606
      %v904 = vpop.f32.mrb[0].mxu0
      %v905 = vadd.f32 %v490, %v904
      %v906 = vpop.f32.mrb[0].mxu0
      %v907 = vadd.f32 %v490, %v906
      %v908 = vpop.f32.mrb[0].mxu0
      %v909 = vadd.f32 %v495, %v908
      %v910 = vpop.f32.mrb[0].mxu0
      %v911 = vadd.f32 %v495, %v910
      %912 = vmatprep.mubr.bf16.mxu0 0
      %913 = vmatmul.mubr.bf16.gmra.mrb[0].mxu0 %v609
      %v914 = vpop.f32.mrb[0].mxu0
      %v915 = vadd.f32 %v500, %v914
      %v916 = vpop.f32.mrb[0].mxu0
      %v917 = vadd.f32 %v500, %v916
      %v918 = vpop.f32.mrb[0].mxu0
      %v919 = vadd.f32 %v505, %v918
      %v920 = vpop.f32.mrb[0].mxu0
      %v921 = vadd.f32 %v505, %v920
      %922 = vmatprep.mubr.bf16.mxu0 0
      %923 = vmatmul.mubr.bf16.gmra.mrb[0].mxu0 %v612
      %v924 = vpop.f32.mrb[0].mxu0
      %v925 = vadd.f32 %v510, %v924
      %v926 = vpop.f32.mrb[0].mxu0
      %v927 = vadd.f32 %v510, %v926
      %v928 = vpop.f32.mrb[0].mxu0
      %v929 = vadd.f32 %v515, %v928
      %v930 = vpop.f32.mrb[0].mxu0
      %v931 = vadd.f32 %v515, %v930
      %932 = vdwg.mxu0
      %v933 = vmax.f32 %v662, %v666
      %v934 = vmax.f32 %v933, %v672
      %v935 = vmax.f32 %v934, %v676
      %v936 = vrot.slane %v935, 4
      %v937 = vmax.f32 %v935, %v936
      %v938 = vrot.slane %v937, 2
      %v939 = vmax.f32 %v937, %v938
      %v940 = vrot.slane %v939, 1
      %v941 = vmax.f32 %v939, %v940
      %v942 = vmax.f32 %v664, %v668
      %v943 = vmax.f32 %v942, %v674
      %v944 = vmax.f32 %v943, %v678
      %v945 = vrot.slane %v944, 4
      %v946 = vmax.f32 %v944, %v945
      %v947 = vrot.slane %v946, 2
      %v948 = vmax.f32 %v946, %v947
      %v949 = vrot.slane %v948, 1
      %v950 = vmax.f32 %v948, %v949
      %v951 = vmax.f32 %v815, %v819
      %v952 = vmax.f32 %v951, %v825
      %v953 = vmax.f32 %v952, %v829
      %v954 = vrot.slane %v953, 4
      %v955 = vmax.f32 %v953, %v954
      %v956 = vrot.slane %v955, 2
      %v957 = vmax.f32 %v955, %v956
      %v958 = vrot.slane %v957, 1
      %v959 = vmax.f32 %v957, %v958
      %v960 = vmax.f32 %v817, %v821
      %v961 = vmax.f32 %v960, %v827
      %v962 = vmax.f32 %v961, %v831
      %v963 = vrot.slane %v962, 4
      %v964 = vmax.f32 %v962, %v963
      %v965 = vrot.slane %v964, 2
      %v966 = vmax.f32 %v964, %v965
      %v967 = vrot.slane %v966, 1
      %v968 = vmax.f32 %v966, %v967
      %v969 = vmax.f32 %v682, %v686
      %v970 = vmax.f32 %v969, %v692
      %v971 = vmax.f32 %v970, %v696
      %v972 = vrot.slane %v971, 4
      %v973 = vmax.f32 %v971, %v972
      %v974 = vrot.slane %v973, 2
      %v975 = vmax.f32 %v973, %v974
      %v976 = vrot.slane %v975, 1
      %v977 = vmax.f32 %v975, %v976
      %v978 = vmax.f32 %v684, %v688
      %v979 = vmax.f32 %v978, %v694
      %v980 = vmax.f32 %v979, %v698
      %v981 = vrot.slane %v980, 4
      %v982 = vmax.f32 %v980, %v981
      %v983 = vrot.slane %v982, 2
      %v984 = vmax.f32 %v982, %v983
      %v985 = vrot.slane %v984, 1
      %v986 = vmax.f32 %v984, %v985
      %v987 = vmax.f32 %v835, %v839
      %v988 = vmax.f32 %v987, %v845
      %v989 = vmax.f32 %v988, %v849
      %v990 = vrot.slane %v989, 4
      %v991 = vmax.f32 %v989, %v990
      %v992 = vrot.slane %v991, 2
      %v993 = vmax.f32 %v991, %v992
      %v994 = vrot.slane %v993, 1
      %v995 = vmax.f32 %v993, %v994
      %v996 = vmax.f32 %v837, %v841
      %v997 = vmax.f32 %v996, %v847
      %v998 = vmax.f32 %v997, %v851
      %v999 = vrot.slane %v998, 4
      %v1000 = vmax.f32 %v998, %v999
      %v1001 = vrot.slane %v1000, 2
      %v1002 = vmax.f32 %v1000, %v1001
      %v1003 = vrot.slane %v1002, 1
      %v1004 = vmax.f32 %v1002, %v1003
      %v1005 = vsub.f32 %v662, %v941
      %v1006 = vsub.f32 %v664, %v950
      %v1007 = vsub.f32 %v815, %v959
      %v1008 = vsub.f32 %v817, %v968
      %v1009 = vsub.f32 %v666, %v941
      %v1010 = vsub.f32 %v668, %v950
      %v1011 = vsub.f32 %v819, %v959
      %v1012 = vsub.f32 %v821, %v968
      %v1013 = vsub.f32 %v672, %v941
      %v1014 = vsub.f32 %v674, %v950
      %v1015 = vsub.f32 %v825, %v959
      %v1016 = vsub.f32 %v827, %v968
      %v1017 = vsub.f32 %v676, %v941
      %v1018 = vsub.f32 %v678, %v950
      %v1019 = vsub.f32 %v829, %v959
      %v1020 = vsub.f32 %v831, %v968
      %v1021 = vsub.f32 %v682, %v977
      %v1022 = vsub.f32 %v684, %v986
      %v1023 = vsub.f32 %v835, %v995
      %v1024 = vsub.f32 %v837, %v1004
      %v1025 = vsub.f32 %v686, %v977
      %v1026 = vsub.f32 %v688, %v986
      %v1027 = vsub.f32 %v839, %v995
      %v1028 = vsub.f32 %v841, %v1004
      %v1029 = vsub.f32 %v692, %v977
      %v1030 = vsub.f32 %v694, %v986
      %v1031 = vsub.f32 %v845, %v995
      %v1032 = vsub.f32 %v847, %v1004
      %v1033 = vsub.f32 %v696, %v977
      %v1034 = vsub.f32 %v698, %v986
      %v1035 = vsub.f32 %v849, %v995
      %v1036 = vsub.f32 %v851, %v1004
      %v1037 = vmul.f32 %v1005, 1.442695
      %v1038 = vpow.pop %v1037
      %v1039 = vmul.f32 %v1006, 1.442695
      %v1040 = vpow.pop %v1039
      %v1041 = vmul.f32 %v1007, 1.442695
      %v1042 = vpow.pop %v1041
      %v1043 = vmul.f32 %v1008, 1.442695
      %v1044 = vpow.pop %v1043
      %v1045 = vmul.f32 %v1009, 1.442695
      %v1046 = vpow.pop %v1045
      %v1047 = vmul.f32 %v1010, 1.442695
      %v1048 = vpow.pop %v1047
      %v1049 = vmul.f32 %v1011, 1.442695
      %v1050 = vpow.pop %v1049
      %v1051 = vmul.f32 %v1012, 1.442695
      %v1052 = vpow.pop %v1051
      %v1053 = vmul.f32 %v1013, 1.442695
      %v1054 = vpow.pop %v1053
      %v1055 = vmul.f32 %v1014, 1.442695
      %v1056 = vpow.pop %v1055
      %v1057 = vmul.f32 %v1015, 1.442695
      %v1058 = vpow.pop %v1057
      %v1059 = vmul.f32 %v1016, 1.442695
      %v1060 = vpow.pop %v1059
      %v1061 = vmul.f32 %v1017, 1.442695
      %v1062 = vpow.pop %v1061
      %v1063 = vmul.f32 %v1018, 1.442695
      %v1064 = vpow.pop %v1063
      %v1065 = vmul.f32 %v1019, 1.442695
      %v1066 = vpow.pop %v1065
      %v1067 = vmul.f32 %v1020, 1.442695
      %v1068 = vpow.pop %v1067
      %v1069 = vmul.f32 %v1021, 1.442695
      %v1070 = vpow.pop %v1069
      %v1071 = vmul.f32 %v1022, 1.442695
      %v1072 = vpow.pop %v1071
      %v1073 = vmul.f32 %v1023, 1.442695
      %v1074 = vpow.pop %v1073
      %v1075 = vmul.f32 %v1024, 1.442695
      %v1076 = vpow.pop %v1075
      %v1077 = vmul.f32 %v1025, 1.442695
      %v1078 = vpow.pop %v1077
      %v1079 = vmul.f32 %v1026, 1.442695
      %v1080 = vpow.pop %v1079
      %v1081 = vmul.f32 %v1027, 1.442695
      %v1082 = vpow.pop %v1081
      %v1083 = vmul.f32 %v1028, 1.442695
      %v1084 = vpow.pop %v1083
      %v1085 = vmul.f32 %v1029, 1.442695
      %v1086 = vpow.pop %v1085
      %v1087 = vmul.f32 %v1030, 1.442695
      %v1088 = vpow.pop %v1087
      %v1089 = vmul.f32 %v1031, 1.442695
      %v1090 = vpow.pop %v1089
      %v1091 = vmul.f32 %v1032, 1.442695
      %v1092 = vpow.pop %v1091
      %v1093 = vmul.f32 %v1033, 1.442695
      %v1094 = vpow.pop %v1093
      %v1095 = vmul.f32 %v1034, 1.442695
      %v1096 = vpow.pop %v1095
      %v1097 = vmul.f32 %v1035, 1.442695
      %v1098 = vpow.pop %v1097
      %v1099 = vmul.f32 %v1036, 1.442695
      %v1100 = vpow.pop %v1099
      %v1101 = vadd.f32 %v1038, %v1046
      %v1102 = vadd.f32 %v1101, %v1054
      %v1103 = vadd.f32 %v1102, %v1062
      %v1104 = vrot.slane %v1103, 4
      %v1105 = vadd.f32 %v1103, %v1104
      %v1106 = vrot.slane %v1105, 2
      %v1107 = vadd.f32 %v1105, %v1106
      %v1108 = vrot.slane %v1107, 1
      %v1109 = vadd.f32 %v1107, %v1108
      %v1110 = vadd.f32 %v1040, %v1048
      %v1111 = vadd.f32 %v1110, %v1056
      %v1112 = vadd.f32 %v1111, %v1064
      %v1113 = vrot.slane %v1112, 4
      %v1114 = vadd.f32 %v1112, %v1113
      %v1115 = vrot.slane %v1114, 2
      %v1116 = vadd.f32 %v1114, %v1115
      %v1117 = vrot.slane %v1116, 1
      %v1118 = vadd.f32 %v1116, %v1117
      %v1119 = vadd.f32 %v1042, %v1050
      %v1120 = vadd.f32 %v1119, %v1058
      %v1121 = vadd.f32 %v1120, %v1066
      %v1122 = vrot.slane %v1121, 4
      %v1123 = vadd.f32 %v1121, %v1122
      %v1124 = vrot.slane %v1123, 2
      %v1125 = vadd.f32 %v1123, %v1124
      %v1126 = vrot.slane %v1125, 1
      %v1127 = vadd.f32 %v1125, %v1126
      %v1128 = vadd.f32 %v1044, %v1052
      %v1129 = vadd.f32 %v1128, %v1060
      %v1130 = vadd.f32 %v1129, %v1068
      %v1131 = vrot.slane %v1130, 4
      %v1132 = vadd.f32 %v1130, %v1131
      %v1133 = vrot.slane %v1132, 2
      %v1134 = vadd.f32 %v1132, %v1133
      %v1135 = vrot.slane %v1134, 1
      %v1136 = vadd.f32 %v1134, %v1135
      %v1137 = vadd.f32 %v1070, %v1078
      %v1138 = vadd.f32 %v1137, %v1086
      %v1139 = vadd.f32 %v1138, %v1094
      %v1140 = vrot.slane %v1139, 4
      %v1141 = vadd.f32 %v1139, %v1140
      %v1142 = vrot.slane %v1141, 2
      %v1143 = vadd.f32 %v1141, %v1142
      %v1144 = vrot.slane %v1143, 1
      %v1145 = vadd.f32 %v1143, %v1144
      %v1146 = vadd.f32 %v1072, %v1080
      %v1147 = vadd.f32 %v1146, %v1088
      %v1148 = vadd.f32 %v1147, %v1096
      %v1149 = vrot.slane %v1148, 4
      %v1150 = vadd.f32 %v1148, %v1149
      %v1151 = vrot.slane %v1150, 2
      %v1152 = vadd.f32 %v1150, %v1151
      %v1153 = vrot.slane %v1152, 1
      %v1154 = vadd.f32 %v1152, %v1153
      %v1155 = vadd.f32 %v1074, %v1082
      %v1156 = vadd.f32 %v1155, %v1090
      %v1157 = vadd.f32 %v1156, %v1098
      %v1158 = vrot.slane %v1157, 4
      %v1159 = vadd.f32 %v1157, %v1158
      %v1160 = vrot.slane %v1159, 2
      %v1161 = vadd.f32 %v1159, %v1160
      %v1162 = vrot.slane %v1161, 1
      %v1163 = vadd.f32 %v1161, %v1162
      %v1164 = vadd.f32 %v1076, %v1084
      %v1165 = vadd.f32 %v1164, %v1092
      %v1166 = vadd.f32 %v1165, %v1100
      %v1167 = vrot.slane %v1166, 4
      %v1168 = vadd.f32 %v1166, %v1167
      %v1169 = vrot.slane %v1168, 2
      %v1170 = vadd.f32 %v1168, %v1169
      %v1171 = vrot.slane %v1170, 1
      %v1172 = vadd.f32 %v1170, %v1171
      %v1173 = vrcp.pop %v1109
      %v1174 = vrcp.pop %v1118
      %v1175 = vrcp.pop %v1127
      %v1176 = vrcp.pop %v1136
      %v1177 = vrcp.pop %v1145
      %v1178 = vrcp.pop %v1154
      %v1179 = vrcp.pop %v1163
      %v1180 = vrcp.pop %v1172
      %v1181 = vmul.f32 %v1038, %v1173
      %v1182 = vmul.f32 %v1040, %v1174
      %v1183 = vmul.f32 %v1042, %v1175
      %v1184 = vmul.f32 %v1044, %v1176
      %v1185 = vmul.f32 %v1046, %v1173
      %v1186 = vmul.f32 %v1048, %v1174
      %v1187 = vmul.f32 %v1050, %v1175
      %v1188 = vmul.f32 %v1052, %v1176
      %v1189 = vmul.f32 %v1054, %v1173
      %v1190 = vmul.f32 %v1056, %v1174
      %v1191 = vmul.f32 %v1058, %v1175
      %v1192 = vmul.f32 %v1060, %v1176
      %v1193 = vmul.f32 %v1062, %v1173
      %v1194 = vmul.f32 %v1064, %v1174
      %v1195 = vmul.f32 %v1066, %v1175
      %v1196 = vmul.f32 %v1068, %v1176
      %v1197 = vmul.f32 %v1070, %v1177
      %v1198 = vmul.f32 %v1072, %v1178
      %v1199 = vmul.f32 %v1074, %v1179
      %v1200 = vmul.f32 %v1076, %v1180
      %v1201 = vmul.f32 %v1078, %v1177
      %v1202 = vmul.f32 %v1080, %v1178
      %v1203 = vmul.f32 %v1082, %v1179
      %v1204 = vmul.f32 %v1084, %v1180
      %v1205 = vmul.f32 %v1086, %v1177
      %v1206 = vmul.f32 %v1088, %v1178
      %v1207 = vmul.f32 %v1090, %v1179
      %v1208 = vmul.f32 %v1092, %v1180
      %v1209 = vmul.f32 %v1094, %v1177
      %v1210 = vmul.f32 %v1096, %v1178
      %v1211 = vmul.f32 %v1098, %v1179
      %v1212 = vmul.f32 %v1100, %v1180
      %v1213 = vmax.f32 %v702, %v704
      %1214 = vmax.xlane.f32.xlu0 %v1213
      %v1215 = vpop.xlane.xlu0 %1214
      %v1216 = vmax.f32 %v706, %v708
      %1217 = vmax.xlane.f32.xlu0 %v1216
      %v1218 = vpop.xlane.xlu0 %1217
      %v1219 = vmax.f32 %v712, %v714
      %1220 = vmax.xlane.f32.xlu0 %v1219
      %v1221 = vpop.xlane.xlu0 %1220
      %v1222 = vmax.f32 %v716, %v718
      %1223 = vmax.xlane.f32.xlu0 %v1222
      %v1224 = vpop.xlane.xlu0 %1223
      %v1225 = vmax.f32 %v722, %v724
      %1226 = vmax.xlane.f32.xlu0 %v1225
      %v1227 = vpop.xlane.xlu0 %1226
      %v1228 = vmax.f32 %v726, %v728
      %1229 = vmax.xlane.f32.xlu0 %v1228
      %v1230 = vpop.xlane.xlu0 %1229
      %v1231 = vmax.f32 %v732, %v734
      %1232 = vmax.xlane.f32.xlu0 %v1231
      %v1233 = vpop.xlane.xlu0 %1232
      %v1234 = vmax.f32 %v736, %v738
      %1235 = vmax.xlane.f32.xlu0 %v1234
      %v1236 = vpop.xlane.xlu0 %1235
      %v1237 = vsub.f32 %v702, %v1215
      %v1238 = vsub.f32 %v704, %v1215
      %v1239 = vsub.f32 %v706, %v1218
      %v1240 = vsub.f32 %v708, %v1218
      %v1241 = vsub.f32 %v712, %v1221
      %v1242 = vsub.f32 %v714, %v1221
      %v1243 = vsub.f32 %v716, %v1224
      %v1244 = vsub.f32 %v718, %v1224
      %v1245 = vsub.f32 %v722, %v1227
      %v1246 = vsub.f32 %v724, %v1227
      %v1247 = vsub.f32 %v726, %v1230
      %v1248 = vsub.f32 %v728, %v1230
      %v1249 = vsub.f32 %v732, %v1233
      %v1250 = vsub.f32 %v734, %v1233
      %v1251 = vsub.f32 %v736, %v1236
      %v1252 = vsub.f32 %v738, %v1236
      %v1253 = vmul.f32 %v1237, 1.442695
      %v1254 = vpow.pop %v1253
      %v1255 = vmul.f32 %v1238, 1.442695
      %v1256 = vpow.pop %v1255
      %v1257 = vmul.f32 %v1239, 1.442695
      %v1258 = vpow.pop %v1257
      %v1259 = vmul.f32 %v1240, 1.442695
      %v1260 = vpow.pop %v1259
      %v1261 = vmul.f32 %v1241, 1.442695
      %v1262 = vpow.pop %v1261
      %v1263 = vmul.f32 %v1242, 1.442695
      %v1264 = vpow.pop %v1263
      %v1265 = vmul.f32 %v1243, 1.442695
      %v1266 = vpow.pop %v1265
      %v1267 = vmul.f32 %v1244, 1.442695
      %v1268 = vpow.pop %v1267
      %v1269 = vmul.f32 %v1245, 1.442695
      %v1270 = vpow.pop %v1269
      %v1271 = vmul.f32 %v1246, 1.442695
      %v1272 = vpow.pop %v1271
      %v1273 = vmul.f32 %v1247, 1.442695
      %v1274 = vpow.pop %v1273
      %v1275 = vmul.f32 %v1248, 1.442695
      %v1276 = vpow.pop %v1275
      %v1277 = vmul.f32 %v1249, 1.442695
      %v1278 = vpow.pop %v1277
      %v1279 = vmul.f32 %v1250, 1.442695
      %v1280 = vpow.pop %v1279
      %v1281 = vmul.f32 %v1251, 1.442695
      %v1282 = vpow.pop %v1281
      %v1283 = vmul.f32 %v1252, 1.442695
      %v1284 = vpow.pop %v1283
      %v1285 = vadd.f32 %v1254, %v1256
      %1286 = vadd.xlane.f32.xlu0 %v1285
      %v1287 = vpop.xlane.xlu0 %1286
      %v1288 = vadd.f32 %v1258, %v1260
      %1289 = vadd.xlane.f32.xlu0 %v1288
      %v1290 = vpop.xlane.xlu0 %1289
      %v1291 = vadd.f32 %v1262, %v1264
      %1292 = vadd.xlane.f32.xlu0 %v1291
      %v1293 = vpop.xlane.xlu0 %1292
      %v1294 = vadd.f32 %v1266, %v1268
      %1295 = vadd.xlane.f32.xlu0 %v1294
      %v1296 = vpop.xlane.xlu0 %1295
      %v1297 = vadd.f32 %v1270, %v1272
      %1298 = vadd.xlane.f32.xlu0 %v1297
      %v1299 = vpop.xlane.xlu0 %1298
      %v1300 = vadd.f32 %v1274, %v1276
      %1301 = vadd.xlane.f32.xlu0 %v1300
      %v1302 = vpop.xlane.xlu0 %1301
      %v1303 = vadd.f32 %v1278, %v1280
      %1304 = vadd.xlane.f32.xlu0 %v1303
      %v1305 = vpop.xlane.xlu0 %1304
      %v1306 = vadd.f32 %v1282, %v1284
      %1307 = vadd.xlane.f32.xlu0 %v1306
      %v1308 = vpop.xlane.xlu0 %1307
      %v1309 = vrcp.pop %v1287
      %v1310 = vrcp.pop %v1290
      %v1311 = vrcp.pop %v1293
      %v1312 = vrcp.pop %v1296
      %v1313 = vrcp.pop %v1299
      %v1314 = vrcp.pop %v1302
      %v1315 = vrcp.pop %v1305
      %v1316 = vrcp.pop %v1308
      %v1317 = vmul.f32 %v1254, %v1309
      %v1318 = vmul.f32 %v1256, %v1309
      %v1319 = vmul.f32 %v1258, %v1310
      %v1320 = vmul.f32 %v1260, %v1310
      %v1321 = vmul.f32 %v1262, %v1311
      %v1322 = vmul.f32 %v1264, %v1311
      %v1323 = vmul.f32 %v1266, %v1312
      %v1324 = vmul.f32 %v1268, %v1312
      %v1325 = vmul.f32 %v1270, %v1313
      %v1326 = vmul.f32 %v1272, %v1313
      %v1327 = vmul.f32 %v1274, %v1314
      %v1328 = vmul.f32 %v1276, %v1314
      %v1329 = vmul.f32 %v1278, %v1315
      %v1330 = vmul.f32 %v1280, %v1315
      %v1331 = vmul.f32 %v1282, %v1316
      %v1332 = vmul.f32 %v1284, %v1316
      %v1333 = vpack.c.bf16 %v1319, %v1317
      %v1334 = vpack.c.bf16 %v1320, %v1318
      %v1335 = vpack.c.bf16 %v1323, %v1321
      %v1336 = vpack.c.bf16 %v1324, %v1322
      %v1337 = vpack.c.bf16 %v1327, %v1325
      %v1338 = vpack.c.bf16 %v1328, %v1326
      %v1339 = vpack.c.bf16 %v1331, %v1329
      %v1340 = vpack.c.bf16 %v1332, %v1330
      %v1341 = vpack.c.bf16 %v746, %v742
      %v1342 = vpack.c.bf16 %v748, %v744
      %v1343 = vpack.c.bf16 %v756, %v752
      %v1344 = vpack.c.bf16 %v758, %v754
      %v1345 = vpack.c.bf16 %v766, %v762
      %v1346 = vpack.c.bf16 %v768, %v764
      %v1347 = vpack.c.bf16 %v776, %v772
      %v1348 = vpack.c.bf16 %v778, %v774
      %1349 = vmatprep.subr.bf16.mxu0 %v1342
      %1350 = vmatpush1.bf16.xpose.msra.mxu0 %v1341
      %1351 = vmatprep.subr.bf16.mxu0 %v1344
      %1352 = vmatpush1.bf16.xpose.msra.mxu0 %v1343
      %1353 = vmatprep.subr.bf16.mxu0 0
      %1354 = vmatpush1.bf16.xpose.msra.mxu0 0
      %1355 = vmatprep.subr.bf16.mxu0 0
      %1356 = vmatpush1.bf16.xpose.msra.mxu0 0
      %1357 = vmatprep.subr.bf16.mxu0 0
      %1358 = vmatpush1.bf16.xpose.msra.mxu0 0
      %1359 = vmatprep.subr.bf16.mxu0 0
      %1360 = vmatpush1.bf16.xpose.msra.mxu0 0
      %1361 = vmatprep.subr.bf16.mxu0 0
      %1362 = vmatpush1.bf16.xpose.msra.mxu0 0
      %1363 = vmatprep.subr.bf16.mxu0 0
      %1364 = vmatpush1.bf16.xpose.msra.mxu0 0
      %1365 = vmatprep.subr.bf16.mxu0 0
      %1366 = vmatpush1.bf16.xpose.msra.mxu0 0
      %1367 = vmatprep.subr.bf16.mxu0 0
      %1368 = vmatpush1.bf16.xpose.msra.mxu0 0
      %1369 = vmatprep.subr.bf16.mxu0 0
      %1370 = vmatpush1.bf16.xpose.msra.mxu0 0
      %1371 = vmatprep.subr.bf16.mxu0 0
      %1372 = vmatpush1.bf16.xpose.msra.mxu0 0
      %1373 = vmatprep.subr.bf16.mxu0 0
      %1374 = vmatpush1.bf16.xpose.msra.mxu0 0
      %1375 = vmatprep.subr.bf16.mxu0 0
      %1376 = vmatpush1.bf16.xpose.msra.mxu0 0
      %1377 = vmatprep.subr.bf16.mxu0 0
      %1378 = vmatpush1.bf16.xpose.msra.mxu0 0
      %1379 = vmatprep.subr.bf16.mxu0 0
      %1380 = vmatpush1.bf16.xpose.msra.mxu0 0
      %1381 = vmatprep.mubr.bf16.mxu0 %v1334
      %1382 = vmatmul.mubr.bf16.gmra.mrb[0].mxu0 %v1333
      %v1383 = vpop.f32.mrb[0].mxu0
      %v1384 = vadd.f32 0.0, %v1383
      %v1385 = vpop.f32.mrb[0].mxu0
      %v1386 = vpop.f32.mrb[0].mxu0
      %v1387 = vadd.f32 0.0, %v1386
      %v1388 = vpop.f32.mrb[0].mxu0
      %1389 = vmatprep.mubr.bf16.mxu0 %v1336
      %1390 = vmatmul.mubr.bf16.gmra.mrb[0].mxu0 %v1335
      %v1391 = vpop.f32.mrb[0].mxu0
      %v1392 = vadd.f32 0.0, %v1391
      %v1393 = vpop.f32.mrb[0].mxu0
      %v1394 = vpop.f32.mrb[0].mxu0
      %v1395 = vadd.f32 0.0, %v1394
      %v1396 = vpop.f32.mrb[0].mxu0
      %1397 = vdwg.mxu0
      %1398 = vmatprep.subr.bf16.mxu0 %v1346
      %1399 = vmatpush1.bf16.xpose.msra.mxu0 %v1345
      %1400 = vmatprep.subr.bf16.mxu0 %v1348
      %1401 = vmatpush1.bf16.xpose.msra.mxu0 %v1347
      %1402 = vmatprep.subr.bf16.mxu0 0
      %1403 = vmatpush1.bf16.xpose.msra.mxu0 0
      %1404 = vmatprep.subr.bf16.mxu0 0
      %1405 = vmatpush1.bf16.xpose.msra.mxu0 0
      %1406 = vmatprep.subr.bf16.mxu0 0
      %1407 = vmatpush1.bf16.xpose.msra.mxu0 0
      %1408 = vmatprep.subr.bf16.mxu0 0
      %1409 = vmatpush1.bf16.xpose.msra.mxu0 0
      %1410 = vmatprep.subr.bf16.mxu0 0
      %1411 = vmatpush1.bf16.xpose.msra.mxu0 0
      %1412 = vmatprep.subr.bf16.mxu0 0
      %1413 = vmatpush1.bf16.xpose.msra.mxu0 0
      %1414 = vmatprep.subr.bf16.mxu0 0
      %1415 = vmatpush1.bf16.xpose.msra.mxu0 0
      %1416 = vmatprep.subr.bf16.mxu0 0
      %1417 = vmatpush1.bf16.xpose.msra.mxu0 0
      %1418 = vmatprep.subr.bf16.mxu0 0
      %1419 = vmatpush1.bf16.xpose.msra.mxu0 0
      %1420 = vmatprep.subr.bf16.mxu0 0
      %1421 = vmatpush1.bf16.xpose.msra.mxu0 0
      %1422 = vmatprep.subr.bf16.mxu0 0
      %1423 = vmatpush1.bf16.xpose.msra.mxu0 0
      %1424 = vmatprep.subr.bf16.mxu0 0
      %1425 = vmatpush1.bf16.xpose.msra.mxu0 0
      %1426 = vmatprep.subr.bf16.mxu0 0
      %1427 = vmatpush1.bf16.xpose.msra.mxu0 0
      %1428 = vmatprep.subr.bf16.mxu0 0
      %1429 = vmatpush1.bf16.xpose.msra.mxu0 0
      %1430 = vmatprep.mubr.bf16.mxu0 %v1338
      %1431 = vmatmul.mubr.bf16.gmra.mrb[0].mxu0 %v1337
      %v1432 = vpop.f32.mrb[0].mxu0
      %v1433 = vadd.f32 0.0, %v1432
      %v1434 = vpop.f32.mrb[0].mxu0
      %v1435 = vpop.f32.mrb[0].mxu0
      %v1436 = vadd.f32 0.0, %v1435
      %v1437 = vpop.f32.mrb[0].mxu0
      %1438 = vmatprep.mubr.bf16.mxu0 %v1340
      %1439 = vmatmul.mubr.bf16.gmra.mrb[0].mxu0 %v1339
      %v1440 = vpop.f32.mrb[0].mxu0
      %v1441 = vadd.f32 0.0, %v1440
      %v1442 = vpop.f32.mrb[0].mxu0
      %v1443 = vpop.f32.mrb[0].mxu0
      %v1444 = vadd.f32 0.0, %v1443
      %v1445 = vpop.f32.mrb[0].mxu0
      %1446 = vdwg.mxu0
      %v1447 = vpack.c.bf16 %v1387, %v1384
      %v1448 = vpack.c.bf16 %v1395, %v1392
      %v1449 = vpack.c.bf16 %v1436, %v1433
      %v1450 = vpack.c.bf16 %v1444, %v1441
      %v1451 = vpack.c.bf16 %v1185, %v1181
      %v1452 = vpack.c.bf16 %v1186, %v1182
      %v1453 = vpack.c.bf16 %v1193, %v1189
      %v1454 = vpack.c.bf16 %v1194, %v1190
      %v1455 = vpack.c.bf16 %v1201, %v1197
      %v1456 = vpack.c.bf16 %v1202, %v1198
      %v1457 = vpack.c.bf16 %v1209, %v1205
      %v1458 = vpack.c.bf16 %v1210, %v1206
      %1459 = vxpose.xlu0.c.b16.start [1/8] %v1447, 128
      %1460 = vxpose.xlu0.c.b16.cont [2/8] %v1448, 128
      %1461 = vxpose.xlu0.c.b16.cont [3/8] 0, 128
      %1462 = vxpose.xlu0.c.b16.cont [4/8] 0, 128
      %1463 = vxpose.xlu0.c.b16.cont [5/8] 0, 128
      %1464 = vxpose.xlu0.c.b16.cont [6/8] 0, 128
      %1465 = vxpose.xlu0.c.b16.cont [7/8] 0, 128
      %1466 = vxpose.xlu0.c.b16.end [8/8] 0, 128
      %v1467 = vpop.trf.xlu0
      %v1468 = vpop.trf.xlu0
      %v1469 = vpop.trf.xlu0
      %v1470 = vpop.trf.xlu0
      %v1471 = vpop.trf.xlu0
      %v1472 = vpop.trf.xlu0
      %v1473 = vpop.trf.xlu0
      %v1474 = vpop.trf.xlu0
      %vm1475 = vcmask 261120
      %v1477 = vsel %vm1475, %v1467, 0
      %v1480 = vsel %vm1475, %v1468, 0
      %1482 = vmatprep.subr.bf16.mxu0 %v1452
      %1483 = vmatpush1.bf16.msra.mxu0 %v1451
      %1484 = vmatprep.subr.bf16.mxu0 %v1454
      %1485 = vmatpush1.bf16.msra.mxu0 %v1453
      %1486 = vmatprep.subr.bf16.mxu0 0
      %1487 = vmatpush1.bf16.msra.mxu0 0
      %1488 = vmatprep.subr.bf16.mxu0 0
      %1489 = vmatpush1.bf16.msra.mxu0 0
      %1490 = vmatprep.subr.bf16.mxu0 0
      %1491 = vmatpush1.bf16.msra.mxu0 0
      %1492 = vmatprep.subr.bf16.mxu0 0
      %1493 = vmatpush1.bf16.msra.mxu0 0
      %1494 = vmatprep.subr.bf16.mxu0 0
      %1495 = vmatpush1.bf16.msra.mxu0 0
      %1496 = vmatprep.subr.bf16.mxu0 0
      %1497 = vmatpush1.bf16.msra.mxu0 0
      %1498 = vmatprep.subr.bf16.mxu0 0
      %1499 = vmatpush1.bf16.msra.mxu0 0
      %1500 = vmatprep.subr.bf16.mxu0 0
      %1501 = vmatpush1.bf16.msra.mxu0 0
      %1502 = vmatprep.subr.bf16.mxu0 0
      %1503 = vmatpush1.bf16.msra.mxu0 0
      %1504 = vmatprep.subr.bf16.mxu0 0
      %1505 = vmatpush1.bf16.msra.mxu0 0
      %1506 = vmatprep.subr.bf16.mxu0 0
      %1507 = vmatpush1.bf16.msra.mxu0 0
      %1508 = vmatprep.subr.bf16.mxu0 0
      %1509 = vmatpush1.bf16.msra.mxu0 0
      %1510 = vmatprep.subr.bf16.mxu0 0
      %1511 = vmatpush1.bf16.msra.mxu0 0
      %1512 = vmatprep.subr.bf16.mxu0 0
      %1513 = vmatpush1.bf16.msra.mxu0 0
      %1514 = vmatprep.mubr.bf16.mxu0 0
      %1515 = vmatmul.mubr.bf16.gmra.mrb[0].mxu0 %v1477
      %v1516 = vpop.f32.mrb[0].mxu0
      %v1517 = vadd.f32 0.0, %v1516
      %v1518 = vpop.f32.mrb[0].mxu0
      %v1519 = vadd.f32 0.0, %v1518
      %v1520 = vpop.f32.mrb[0].mxu0
      %v1521 = vadd.f32 0.0, %v1520
      %v1522 = vpop.f32.mrb[0].mxu0
      %v1523 = vadd.f32 0.0, %v1522
      %1524 = vmatprep.mubr.bf16.mxu0 0
      %1525 = vmatmul.mubr.bf16.gmra.mrb[0].mxu0 %v1480
      %v1526 = vpop.f32.mrb[0].mxu0
      %v1527 = vadd.f32 0.0, %v1526
      %v1528 = vpop.f32.mrb[0].mxu0
      %v1529 = vadd.f32 0.0, %v1528
      %v1530 = vpop.f32.mrb[0].mxu0
      %v1531 = vadd.f32 0.0, %v1530
      %v1532 = vpop.f32.mrb[0].mxu0
      %v1533 = vadd.f32 0.0, %v1532
      %1534 = vdwg.mxu0
      %1535 = vxpose.xlu0.c.b16.start [1/8] %v1449, 128
      %1536 = vxpose.xlu0.c.b16.cont [2/8] %v1450, 128
      %1537 = vxpose.xlu0.c.b16.cont [3/8] 0, 128
      %1538 = vxpose.xlu0.c.b16.cont [4/8] 0, 128
      %1539 = vxpose.xlu0.c.b16.cont [5/8] 0, 128
      %1540 = vxpose.xlu0.c.b16.cont [6/8] 0, 128
      %1541 = vxpose.xlu0.c.b16.cont [7/8] 0, 128
      %1542 = vxpose.xlu0.c.b16.end [8/8] 0, 128
      %v1543 = vpop.trf.xlu0
      %v1544 = vpop.trf.xlu0
      %v1545 = vpop.trf.xlu0
      %v1546 = vpop.trf.xlu0
      %v1547 = vpop.trf.xlu0
      %v1548 = vpop.trf.xlu0
      %v1549 = vpop.trf.xlu0
      %v1550 = vpop.trf.xlu0
      %v1552 = vsel %vm1475, %v1543, 0
      %v1555 = vsel %vm1475, %v1544, 0
      %1557 = vmatprep.subr.bf16.mxu0 %v1456
      %1558 = vmatpush1.bf16.msra.mxu0 %v1455
      %1559 = vmatprep.subr.bf16.mxu0 %v1458
      %1560 = vmatpush1.bf16.msra.mxu0 %v1457
      %1561 = vmatprep.subr.bf16.mxu0 0
      %1562 = vmatpush1.bf16.msra.mxu0 0
      %1563 = vmatprep.subr.bf16.mxu0 0
      %1564 = vmatpush1.bf16.msra.mxu0 0
      %1565 = vmatprep.subr.bf16.mxu0 0
      %1566 = vmatpush1.bf16.msra.mxu0 0
      %1567 = vmatprep.subr.bf16.mxu0 0
      %1568 = vmatpush1.bf16.msra.mxu0 0
      %1569 = vmatprep.subr.bf16.mxu0 0
      %1570 = vmatpush1.bf16.msra.mxu0 0
      %1571 = vmatprep.subr.bf16.mxu0 0
      %1572 = vmatpush1.bf16.msra.mxu0 0
      %1573 = vmatprep.subr.bf16.mxu0 0
      %1574 = vmatpush1.bf16.msra.mxu0 0
      %1575 = vmatprep.subr.bf16.mxu0 0
      %1576 = vmatpush1.bf16.msra.mxu0 0
      %1577 = vmatprep.subr.bf16.mxu0 0
      %1578 = vmatpush1.bf16.msra.mxu0 0
      %1579 = vmatprep.subr.bf16.mxu0 0
      %1580 = vmatpush1.bf16.msra.mxu0 0
      %1581 = vmatprep.subr.bf16.mxu0 0
      %1582 = vmatpush1.bf16.msra.mxu0 0
      %1583 = vmatprep.subr.bf16.mxu0 0
      %1584 = vmatpush1.bf16.msra.mxu0 0
      %1585 = vmatprep.subr.bf16.mxu0 0
      %1586 = vmatpush1.bf16.msra.mxu0 0
      %1587 = vmatprep.subr.bf16.mxu0 0
      %1588 = vmatpush1.bf16.msra.mxu0 0
      %1589 = vmatprep.mubr.bf16.mxu0 0
      %1590 = vmatmul.mubr.bf16.gmra.mrb[0].mxu0 %v1552
      %v1591 = vpop.f32.mrb[0].mxu0
      %v1592 = vadd.f32 0.0, %v1591
      %v1593 = vpop.f32.mrb[0].mxu0
      %v1594 = vadd.f32 0.0, %v1593
      %v1595 = vpop.f32.mrb[0].mxu0
      %v1596 = vadd.f32 0.0, %v1595
      %v1597 = vpop.f32.mrb[0].mxu0
      %v1598 = vadd.f32 0.0, %v1597
      %1599 = vmatprep.mubr.bf16.mxu0 0
      %1600 = vmatmul.mubr.bf16.gmra.mrb[0].mxu0 %v1555
      %v1601 = vpop.f32.mrb[0].mxu0
      %v1602 = vadd.f32 0.0, %v1601
      %v1603 = vpop.f32.mrb[0].mxu0
      %v1604 = vadd.f32 0.0, %v1603
      %v1605 = vpop.f32.mrb[0].mxu0
      %v1606 = vadd.f32 0.0, %v1605
      %v1607 = vpop.f32.mrb[0].mxu0
      %v1608 = vadd.f32 0.0, %v1607
      %1609 = vdwg.mxu0
      %v1610 = vmax.f32 %v855, %v857
      %1611 = vmax.xlane.f32.xlu0 %v1610
      %v1612 = vpop.xlane.xlu0 %1611
      %v1613 = vmax.f32 %v859, %v861
      %1614 = vmax.xlane.f32.xlu0 %v1613
      %v1615 = vpop.xlane.xlu0 %1614
      %v1616 = vmax.f32 %v865, %v867
      %1617 = vmax.xlane.f32.xlu0 %v1616
      %v1618 = vpop.xlane.xlu0 %1617
      %v1619 = vmax.f32 %v869, %v871
      %1620 = vmax.xlane.f32.xlu0 %v1619
      %v1621 = vpop.xlane.xlu0 %1620
      %v1622 = vmax.f32 %v875, %v877
      %1623 = vmax.xlane.f32.xlu0 %v1622
      %v1624 = vpop.xlane.xlu0 %1623
      %v1625 = vmax.f32 %v879, %v881
      %1626 = vmax.xlane.f32.xlu0 %v1625
      %v1627 = vpop.xlane.xlu0 %1626
      %v1628 = vmax.f32 %v885, %v887
      %1629 = vmax.xlane.f32.xlu0 %v1628
      %v1630 = vpop.xlane.xlu0 %1629
      %v1631 = vmax.f32 %v889, %v891
      %1632 = vmax.xlane.f32.xlu0 %v1631
      %v1633 = vpop.xlane.xlu0 %1632
      %v1634 = vsub.f32 %v855, %v1612
      %v1635 = vsub.f32 %v857, %v1612
      %v1636 = vsub.f32 %v859, %v1615
      %v1637 = vsub.f32 %v861, %v1615
      %v1638 = vsub.f32 %v865, %v1618
      %v1639 = vsub.f32 %v867, %v1618
      %v1640 = vsub.f32 %v869, %v1621
      %v1641 = vsub.f32 %v871, %v1621
      %v1642 = vsub.f32 %v875, %v1624
      %v1643 = vsub.f32 %v877, %v1624
      %v1644 = vsub.f32 %v879, %v1627
      %v1645 = vsub.f32 %v881, %v1627
      %v1646 = vsub.f32 %v885, %v1630
      %v1647 = vsub.f32 %v887, %v1630
      %v1648 = vsub.f32 %v889, %v1633
      %v1649 = vsub.f32 %v891, %v1633
      %v1650 = vmul.f32 %v1634, 1.442695
      %v1651 = vpow.pop %v1650
      %v1652 = vmul.f32 %v1635, 1.442695
      %v1653 = vpow.pop %v1652
      %v1654 = vmul.f32 %v1636, 1.442695
      %v1655 = vpow.pop %v1654
      %v1656 = vmul.f32 %v1637, 1.442695
      %v1657 = vpow.pop %v1656
      %v1658 = vmul.f32 %v1638, 1.442695
      %v1659 = vpow.pop %v1658
      %v1660 = vmul.f32 %v1639, 1.442695
      %v1661 = vpow.pop %v1660
      %v1662 = vmul.f32 %v1640, 1.442695
      %v1663 = vpow.pop %v1662
      %v1664 = vmul.f32 %v1641, 1.442695
      %v1665 = vpow.pop %v1664
      %v1666 = vmul.f32 %v1642, 1.442695
      %v1667 = vpow.pop %v1666
      %v1668 = vmul.f32 %v1643, 1.442695
      %v1669 = vpow.pop %v1668
      %v1670 = vmul.f32 %v1644, 1.442695
      %v1671 = vpow.pop %v1670
      %v1672 = vmul.f32 %v1645, 1.442695
      %v1673 = vpow.pop %v1672
      %v1674 = vmul.f32 %v1646, 1.442695
      %v1675 = vpow.pop %v1674
      %v1676 = vmul.f32 %v1647, 1.442695
      %v1677 = vpow.pop %v1676
      %v1678 = vmul.f32 %v1648, 1.442695
      %v1679 = vpow.pop %v1678
      %v1680 = vmul.f32 %v1649, 1.442695
      %v1681 = vpow.pop %v1680
      %v1682 = vadd.f32 %v1651, %v1653
      %1683 = vadd.xlane.f32.xlu0 %v1682
      %v1684 = vpop.xlane.xlu0 %1683
      %v1685 = vadd.f32 %v1655, %v1657
      %1686 = vadd.xlane.f32.xlu0 %v1685
      %v1687 = vpop.xlane.xlu0 %1686
      %v1688 = vadd.f32 %v1659, %v1661
      %1689 = vadd.xlane.f32.xlu0 %v1688
      %v1690 = vpop.xlane.xlu0 %1689
      %v1691 = vadd.f32 %v1663, %v1665
      %1692 = vadd.xlane.f32.xlu0 %v1691
      %v1693 = vpop.xlane.xlu0 %1692
      %v1694 = vadd.f32 %v1667, %v1669
      %1695 = vadd.xlane.f32.xlu0 %v1694
      %v1696 = vpop.xlane.xlu0 %1695
      %v1697 = vadd.f32 %v1671, %v1673
      %1698 = vadd.xlane.f32.xlu0 %v1697
      %v1699 = vpop.xlane.xlu0 %1698
      %v1700 = vadd.f32 %v1675, %v1677
      %1701 = vadd.xlane.f32.xlu0 %v1700
      %v1702 = vpop.xlane.xlu0 %1701
      %v1703 = vadd.f32 %v1679, %v1681
      %1704 = vadd.xlane.f32.xlu0 %v1703
      %v1705 = vpop.xlane.xlu0 %1704
      %v1706 = vrcp.pop %v1684
      %v1707 = vrcp.pop %v1687
      %v1708 = vrcp.pop %v1690
      %v1709 = vrcp.pop %v1693
      %v1710 = vrcp.pop %v1696
      %v1711 = vrcp.pop %v1699
      %v1712 = vrcp.pop %v1702
      %v1713 = vrcp.pop %v1705
      %v1714 = vmul.f32 %v1651, %v1706
      %v1715 = vmul.f32 %v1653, %v1706
      %v1716 = vmul.f32 %v1655, %v1707
      %v1717 = vmul.f32 %v1657, %v1707
      %v1718 = vmul.f32 %v1659, %v1708
      %v1719 = vmul.f32 %v1661, %v1708
      %v1720 = vmul.f32 %v1663, %v1709
      %v1721 = vmul.f32 %v1665, %v1709
      %v1722 = vmul.f32 %v1667, %v1710
      %v1723 = vmul.f32 %v1669, %v1710
      %v1724 = vmul.f32 %v1671, %v1711
      %v1725 = vmul.f32 %v1673, %v1711
      %v1726 = vmul.f32 %v1675, %v1712
      %v1727 = vmul.f32 %v1677, %v1712
      %v1728 = vmul.f32 %v1679, %v1713
      %v1729 = vmul.f32 %v1681, %v1713
      %v1730 = vpack.c.bf16 %v1716, %v1714
      %v1731 = vpack.c.bf16 %v1717, %v1715
      %v1732 = vpack.c.bf16 %v1720, %v1718
      %v1733 = vpack.c.bf16 %v1721, %v1719
      %v1734 = vpack.c.bf16 %v1724, %v1722
      %v1735 = vpack.c.bf16 %v1725, %v1723
      %v1736 = vpack.c.bf16 %v1728, %v1726
      %v1737 = vpack.c.bf16 %v1729, %v1727
      %v1738 = vpack.c.bf16 %v899, %v895
      %v1739 = vpack.c.bf16 %v901, %v897
      %v1740 = vpack.c.bf16 %v909, %v905
      %v1741 = vpack.c.bf16 %v911, %v907
      %v1742 = vpack.c.bf16 %v919, %v915
      %v1743 = vpack.c.bf16 %v921, %v917
      %v1744 = vpack.c.bf16 %v929, %v925
      %v1745 = vpack.c.bf16 %v931, %v927
      %1746 = vmatprep.subr.bf16.mxu0 %v1739
      %1747 = vmatpush1.bf16.xpose.msra.mxu0 %v1738
      %1748 = vmatprep.subr.bf16.mxu0 %v1741
      %1749 = vmatpush1.bf16.xpose.msra.mxu0 %v1740
      %1750 = vmatprep.subr.bf16.mxu0 0
      %1751 = vmatpush1.bf16.xpose.msra.mxu0 0
      %1752 = vmatprep.subr.bf16.mxu0 0
      %1753 = vmatpush1.bf16.xpose.msra.mxu0 0
      %1754 = vmatprep.subr.bf16.mxu0 0
      %1755 = vmatpush1.bf16.xpose.msra.mxu0 0
      %1756 = vmatprep.subr.bf16.mxu0 0
      %1757 = vmatpush1.bf16.xpose.msra.mxu0 0
      %1758 = vmatprep.subr.bf16.mxu0 0
      %1759 = vmatpush1.bf16.xpose.msra.mxu0 0
      %1760 = vmatprep.subr.bf16.mxu0 0
      %1761 = vmatpush1.bf16.xpose.msra.mxu0 0
      %1762 = vmatprep.subr.bf16.mxu0 0
      %1763 = vmatpush1.bf16.xpose.msra.mxu0 0
      %1764 = vmatprep.subr.bf16.mxu0 0
      %1765 = vmatpush1.bf16.xpose.msra.mxu0 0
      %1766 = vmatprep.subr.bf16.mxu0 0
      %1767 = vmatpush1.bf16.xpose.msra.mxu0 0
      %1768 = vmatprep.subr.bf16.mxu0 0
      %1769 = vmatpush1.bf16.xpose.msra.mxu0 0
      %1770 = vmatprep.subr.bf16.mxu0 0
      %1771 = vmatpush1.bf16.xpose.msra.mxu0 0
      %1772 = vmatprep.subr.bf16.mxu0 0
      %1773 = vmatpush1.bf16.xpose.msra.mxu0 0
      %1774 = vmatprep.subr.bf16.mxu0 0
      %1775 = vmatpush1.bf16.xpose.msra.mxu0 0
      %1776 = vmatprep.subr.bf16.mxu0 0
      %1777 = vmatpush1.bf16.xpose.msra.mxu0 0
      %1778 = vmatprep.mubr.bf16.mxu0 %v1731
      %1779 = vmatmul.mubr.bf16.gmra.mrb[0].mxu0 %v1730
      %v1780 = vpop.f32.mrb[0].mxu0
      %v1781 = vadd.f32 0.0, %v1780
      %v1782 = vpop.f32.mrb[0].mxu0
      %v1783 = vpop.f32.mrb[0].mxu0
      %v1784 = vadd.f32 0.0, %v1783
      %v1785 = vpop.f32.mrb[0].mxu0
      %1786 = vmatprep.mubr.bf16.mxu0 %v1733
      %1787 = vmatmul.mubr.bf16.gmra.mrb[0].mxu0 %v1732
      %v1788 = vpop.f32.mrb[0].mxu0
      %v1789 = vadd.f32 0.0, %v1788
      %v1790 = vpop.f32.mrb[0].mxu0
      %v1791 = vpop.f32.mrb[0].mxu0
      %v1792 = vadd.f32 0.0, %v1791
      %v1793 = vpop.f32.mrb[0].mxu0
      %1794 = vdwg.mxu0
      %1795 = vmatprep.subr.bf16.mxu0 %v1743
      %1796 = vmatpush1.bf16.xpose.msra.mxu0 %v1742
      %1797 = vmatprep.subr.bf16.mxu0 %v1745
      %1798 = vmatpush1.bf16.xpose.msra.mxu0 %v1744
      %1799 = vmatprep.subr.bf16.mxu0 0
      %1800 = vmatpush1.bf16.xpose.msra.mxu0 0
      %1801 = vmatprep.subr.bf16.mxu0 0
      %1802 = vmatpush1.bf16.xpose.msra.mxu0 0
      %1803 = vmatprep.subr.bf16.mxu0 0
      %1804 = vmatpush1.bf16.xpose.msra.mxu0 0
      %1805 = vmatprep.subr.bf16.mxu0 0
      %1806 = vmatpush1.bf16.xpose.msra.mxu0 0
      %1807 = vmatprep.subr.bf16.mxu0 0
      %1808 = vmatpush1.bf16.xpose.msra.mxu0 0
      %1809 = vmatprep.subr.bf16.mxu0 0
      %1810 = vmatpush1.bf16.xpose.msra.mxu0 0
      %1811 = vmatprep.subr.bf16.mxu0 0
      %1812 = vmatpush1.bf16.xpose.msra.mxu0 0
      %1813 = vmatprep.subr.bf16.mxu0 0
      %1814 = vmatpush1.bf16.xpose.msra.mxu0 0
      %1815 = vmatprep.subr.bf16.mxu0 0
      %1816 = vmatpush1.bf16.xpose.msra.mxu0 0
      %1817 = vmatprep.subr.bf16.mxu0 0
      %1818 = vmatpush1.bf16.xpose.msra.mxu0 0
      %1819 = vmatprep.subr.bf16.mxu0 0
      %1820 = vmatpush1.bf16.xpose.msra.mxu0 0
      %1821 = vmatprep.subr.bf16.mxu0 0
      %1822 = vmatpush1.bf16.xpose.msra.mxu0 0
      %1823 = vmatprep.subr.bf16.mxu0 0
      %1824 = vmatpush1.bf16.xpose.msra.mxu0 0
      %1825 = vmatprep.subr.bf16.mxu0 0
      %1826 = vmatpush1.bf16.xpose.msra.mxu0 0
      %1827 = vmatprep.mubr.bf16.mxu0 %v1735
      %1828 = vmatmul.mubr.bf16.gmra.mrb[0].mxu0 %v1734
      %v1829 = vpop.f32.mrb[0].mxu0
      %v1830 = vadd.f32 0.0, %v1829
      %v1831 = vpop.f32.mrb[0].mxu0
      %v1832 = vpop.f32.mrb[0].mxu0
      %v1833 = vadd.f32 0.0, %v1832
      %v1834 = vpop.f32.mrb[0].mxu0
      %1835 = vmatprep.mubr.bf16.mxu0 %v1737
      %1836 = vmatmul.mubr.bf16.gmra.mrb[0].mxu0 %v1736
      %v1837 = vpop.f32.mrb[0].mxu0
      %v1838 = vadd.f32 0.0, %v1837
      %v1839 = vpop.f32.mrb[0].mxu0
      %v1840 = vpop.f32.mrb[0].mxu0
      %v1841 = vadd.f32 0.0, %v1840
      %v1842 = vpop.f32.mrb[0].mxu0
      %1843 = vdwg.mxu0
      %v1844 = vpack.c.bf16 %v1784, %v1781
      %v1845 = vpack.c.bf16 %v1792, %v1789
      %v1846 = vpack.c.bf16 %v1833, %v1830
      %v1847 = vpack.c.bf16 %v1841, %v1838
      %v1848 = vpack.c.bf16 %v1187, %v1183
      %v1849 = vpack.c.bf16 %v1188, %v1184
      %v1850 = vpack.c.bf16 %v1195, %v1191
      %v1851 = vpack.c.bf16 %v1196, %v1192
      %v1852 = vpack.c.bf16 %v1203, %v1199
      %v1853 = vpack.c.bf16 %v1204, %v1200
      %v1854 = vpack.c.bf16 %v1211, %v1207
      %v1855 = vpack.c.bf16 %v1212, %v1208
      %1856 = vxpose.xlu0.c.b16.start [1/8] %v1844, 128
      %1857 = vxpose.xlu0.c.b16.cont [2/8] %v1845, 128
      %1858 = vxpose.xlu0.c.b16.cont [3/8] 0, 128
      %1859 = vxpose.xlu0.c.b16.cont [4/8] 0, 128
      %1860 = vxpose.xlu0.c.b16.cont [5/8] 0, 128
      %1861 = vxpose.xlu0.c.b16.cont [6/8] 0, 128
      %1862 = vxpose.xlu0.c.b16.cont [7/8] 0, 128
      %1863 = vxpose.xlu0.c.b16.end [8/8] 0, 128
      %v1864 = vpop.trf.xlu0
      %v1865 = vpop.trf.xlu0
      %v1866 = vpop.trf.xlu0
      %v1867 = vpop.trf.xlu0
      %v1868 = vpop.trf.xlu0
      %v1869 = vpop.trf.xlu0
      %v1870 = vpop.trf.xlu0
      %v1871 = vpop.trf.xlu0
      %v1873 = vsel %vm1475, %v1864, 0
      %v1876 = vsel %vm1475, %v1865, 0
      %1878 = vmatprep.subr.bf16.mxu0 %v1849
      %1879 = vmatpush1.bf16.msra.mxu0 %v1848
      %1880 = vmatprep.subr.bf16.mxu0 %v1851
      %1881 = vmatpush1.bf16.msra.mxu0 %v1850
      %1882 = vmatprep.subr.bf16.mxu0 0
      %1883 = vmatpush1.bf16.msra.mxu0 0
      %1884 = vmatprep.subr.bf16.mxu0 0
      %1885 = vmatpush1.bf16.msra.mxu0 0
      %1886 = vmatprep.subr.bf16.mxu0 0
      %1887 = vmatpush1.bf16.msra.mxu0 0
      %1888 = vmatprep.subr.bf16.mxu0 0
      %1889 = vmatpush1.bf16.msra.mxu0 0
      %1890 = vmatprep.subr.bf16.mxu0 0
      %1891 = vmatpush1.bf16.msra.mxu0 0
      %1892 = vmatprep.subr.bf16.mxu0 0
      %1893 = vmatpush1.bf16.msra.mxu0 0
      %1894 = vmatprep.subr.bf16.mxu0 0
      %1895 = vmatpush1.bf16.msra.mxu0 0
      %1896 = vmatprep.subr.bf16.mxu0 0
      %1897 = vmatpush1.bf16.msra.mxu0 0
      %1898 = vmatprep.subr.bf16.mxu0 0
      %1899 = vmatpush1.bf16.msra.mxu0 0
      %1900 = vmatprep.subr.bf16.mxu0 0
      %1901 = vmatpush1.bf16.msra.mxu0 0
      %1902 = vmatprep.subr.bf16.mxu0 0
      %1903 = vmatpush1.bf16.msra.mxu0 0
      %1904 = vmatprep.subr.bf16.mxu0 0
      %1905 = vmatpush1.bf16.msra.mxu0 0
      %1906 = vmatprep.subr.bf16.mxu0 0
      %1907 = vmatpush1.bf16.msra.mxu0 0
      %1908 = vmatprep.subr.bf16.mxu0 0
      %1909 = vmatpush1.bf16.msra.mxu0 0
      %1910 = vmatprep.mubr.bf16.mxu0 0
      %1911 = vmatmul.mubr.bf16.gmra.mrb[0].mxu0 %v1873
      %v1912 = vpop.f32.mrb[0].mxu0
      %v1913 = vadd.f32 0.0, %v1912
      %v1914 = vpop.f32.mrb[0].mxu0
      %v1915 = vadd.f32 0.0, %v1914
      %v1916 = vpop.f32.mrb[0].mxu0
      %v1917 = vadd.f32 0.0, %v1916
      %v1918 = vpop.f32.mrb[0].mxu0
      %v1919 = vadd.f32 0.0, %v1918
      %1920 = vmatprep.mubr.bf16.mxu0 0
      %1921 = vmatmul.mubr.bf16.gmra.mrb[0].mxu0 %v1876
      %v1922 = vpop.f32.mrb[0].mxu0
      %v1923 = vadd.f32 0.0, %v1922
      %v1924 = vpop.f32.mrb[0].mxu0
      %v1925 = vadd.f32 0.0, %v1924
      %v1926 = vpop.f32.mrb[0].mxu0
      %v1927 = vadd.f32 0.0, %v1926
      %v1928 = vpop.f32.mrb[0].mxu0
      %v1929 = vadd.f32 0.0, %v1928
      %1930 = vdwg.mxu0
      %1931 = vxpose.xlu0.c.b16.start [1/8] %v1846, 128
      %1932 = vxpose.xlu0.c.b16.cont [2/8] %v1847, 128
      %1933 = vxpose.xlu0.c.b16.cont [3/8] 0, 128
      %1934 = vxpose.xlu0.c.b16.cont [4/8] 0, 128
      %1935 = vxpose.xlu0.c.b16.cont [5/8] 0, 128
      %1936 = vxpose.xlu0.c.b16.cont [6/8] 0, 128
      %1937 = vxpose.xlu0.c.b16.cont [7/8] 0, 128
      %1938 = vxpose.xlu0.c.b16.end [8/8] 0, 128
      %v1939 = vpop.trf.xlu0
      %v1940 = vpop.trf.xlu0
      %v1941 = vpop.trf.xlu0
      %v1942 = vpop.trf.xlu0
      %v1943 = vpop.trf.xlu0
      %v1944 = vpop.trf.xlu0
      %v1945 = vpop.trf.xlu0
      %v1946 = vpop.trf.xlu0
      %v1948 = vsel %vm1475, %v1939, 0
      %v1951 = vsel %vm1475, %v1940, 0
      %1953 = vmatprep.subr.bf16.mxu0 %v1853
      %1954 = vmatpush1.bf16.msra.mxu0 %v1852
      %1955 = vmatprep.subr.bf16.mxu0 %v1855
      %1956 = vmatpush1.bf16.msra.mxu0 %v1854
      %1957 = vmatprep.subr.bf16.mxu0 0
      %1958 = vmatpush1.bf16.msra.mxu0 0
      %1959 = vmatprep.subr.bf16.mxu0 0
      %1960 = vmatpush1.bf16.msra.mxu0 0
      %1961 = vmatprep.subr.bf16.mxu0 0
      %1962 = vmatpush1.bf16.msra.mxu0 0
      %1963 = vmatprep.subr.bf16.mxu0 0
      %1964 = vmatpush1.bf16.msra.mxu0 0
      %1965 = vmatprep.subr.bf16.mxu0 0
      %1966 = vmatpush1.bf16.msra.mxu0 0
      %1967 = vmatprep.subr.bf16.mxu0 0
      %1968 = vmatpush1.bf16.msra.mxu0 0
      %1969 = vmatprep.subr.bf16.mxu0 0
      %1970 = vmatpush1.bf16.msra.mxu0 0
      %1971 = vmatprep.subr.bf16.mxu0 0
      %1972 = vmatpush1.bf16.msra.mxu0 0
      %1973 = vmatprep.subr.bf16.mxu0 0
      %1974 = vmatpush1.bf16.msra.mxu0 0
      %1975 = vmatprep.subr.bf16.mxu0 0
      %1976 = vmatpush1.bf16.msra.mxu0 0
      %1977 = vmatprep.subr.bf16.mxu0 0
      %1978 = vmatpush1.bf16.msra.mxu0 0
      %1979 = vmatprep.subr.bf16.mxu0 0
      %1980 = vmatpush1.bf16.msra.mxu0 0
      %1981 = vmatprep.subr.bf16.mxu0 0
      %1982 = vmatpush1.bf16.msra.mxu0 0
      %1983 = vmatprep.subr.bf16.mxu0 0
      %1984 = vmatpush1.bf16.msra.mxu0 0
      %1985 = vmatprep.mubr.bf16.mxu0 0
      %1986 = vmatmul.mubr.bf16.gmra.mrb[0].mxu0 %v1948
      %v1987 = vpop.f32.mrb[0].mxu0
      %v1988 = vadd.f32 0.0, %v1987
      %v1989 = vpop.f32.mrb[0].mxu0
      %v1990 = vadd.f32 0.0, %v1989
      %v1991 = vpop.f32.mrb[0].mxu0
      %v1992 = vadd.f32 0.0, %v1991
      %v1993 = vpop.f32.mrb[0].mxu0
      %v1994 = vadd.f32 0.0, %v1993
      %1995 = vmatprep.mubr.bf16.mxu0 0
      %1996 = vmatmul.mubr.bf16.gmra.mrb[0].mxu0 %v1951
      %v1997 = vpop.f32.mrb[0].mxu0
      %v1998 = vadd.f32 0.0, %v1997
      %v1999 = vpop.f32.mrb[0].mxu0
      %v2000 = vadd.f32 0.0, %v1999
      %v2001 = vpop.f32.mrb[0].mxu0
      %v2002 = vadd.f32 0.0, %v2001
      %v2003 = vpop.f32.mrb[0].mxu0
      %v2004 = vadd.f32 0.0, %v2003
      %2005 = vdwg.mxu0
      %v2006 = vld [vmem:[%s3] sm:$0x3]
      %v2007 = vpack.c.bf16 %v1521, %v1517
      %v2008 = vpack.c.bf16 %v1523, %v1519
      %v2009 = vpack.c.bf16 %v1917, %v1913
      %v2010 = vpack.c.bf16 %v1919, %v1915
      %v2011 = vpack.c.bf16 %v1531, %v1527
      %v2012 = vpack.c.bf16 %v1533, %v1529
      %v2013 = vpack.c.bf16 %v1927, %v1923
      %v2014 = vpack.c.bf16 %v1929, %v1925
      %v2015 = vpack.c.bf16 %v1596, %v1592
      %v2016 = vpack.c.bf16 %v1598, %v1594
      %v2017 = vpack.c.bf16 %v1992, %v1988
      %v2018 = vpack.c.bf16 %v1994, %v1990
      %v2019 = vpack.c.bf16 %v1606, %v1602
      %v2020 = vpack.c.bf16 %v1608, %v1604
      %v2021 = vpack.c.bf16 %v2002, %v1998
      %v2022 = vpack.c.bf16 %v2004, %v2000
      %v2023 = vld [vmem:[%s4] sm:$0xf]
      %2025 = vset.pattern.permute.xlu0 0
      %2026 = vperm.xlu0 %2025, %v2023
      %v2027 = vpop.permute.xlu0 %2026
      %vm2029 = vcmask 523264
      %v2031 = vsel %vm2029, %v2006, 0
      %2033 = vmatprep.subr.bf16.mxu0 %v2008
      %2034 = vmatpush1.bf16.msra.mxu0 %v2007
      %2035 = vmatprep.subr.bf16.mxu0 %v2012
      %2036 = vmatpush1.bf16.msra.mxu0 %v2011
      %2037 = vmatprep.subr.bf16.mxu0 %v2016
      %2038 = vmatpush1.bf16.msra.mxu0 %v2015
      %2039 = vmatprep.subr.bf16.mxu0 %v2020
      %2040 = vmatpush1.bf16.msra.mxu0 %v2019
      %2041 = vmatprep.subr.bf16.mxu0 0
      %2042 = vmatpush1.bf16.msra.mxu0 0
      %2043 = vmatprep.subr.bf16.mxu0 0
      %2044 = vmatpush1.bf16.msra.mxu0 0
      %2045 = vmatprep.subr.bf16.mxu0 0
      %2046 = vmatpush1.bf16.msra.mxu0 0
      %2047 = vmatprep.subr.bf16.mxu0 0
      %2048 = vmatpush1.bf16.msra.mxu0 0
      %2049 = vmatprep.subr.bf16.mxu0 0
      %2050 = vmatpush1.bf16.msra.mxu0 0
      %2051 = vmatprep.subr.bf16.mxu0 0
      %2052 = vmatpush1.bf16.msra.mxu0 0
      %2053 = vmatprep.subr.bf16.mxu0 0
      %2054 = vmatpush1.bf16.msra.mxu0 0
      %2055 = vmatprep.subr.bf16.mxu0 0
      %2056 = vmatpush1.bf16.msra.mxu0 0
      %2057 = vmatprep.subr.bf16.mxu0 0
      %2058 = vmatpush1.bf16.msra.mxu0 0
      %2059 = vmatprep.subr.bf16.mxu0 0
      %2060 = vmatpush1.bf16.msra.mxu0 0
      %2061 = vmatprep.subr.bf16.mxu0 0
      %2062 = vmatpush1.bf16.msra.mxu0 0
      %2063 = vmatprep.subr.bf16.mxu0 0
      %2064 = vmatpush1.bf16.msra.mxu0 0
      %2065 = vmatprep.mubr.bf16.mxu0 0
      %2066 = vmatmul.mubr.bf16.gmra.mrb[0].mxu0 %v2031
      %v2067 = vpop.f32.mrb[0].mxu0
      %v2068 = vadd.f32 %v2027, %v2067
      %v2069 = vpop.f32.mrb[0].mxu0
      %v2070 = vadd.f32 %v2027, %v2069
      %v2071 = vpop.f32.mrb[0].mxu0
      %v2072 = vpop.f32.mrb[0].mxu0
      %2073 = vdwg.mxu0
      %2074 = vmatprep.subr.bf16.mxu0 %v2010
      %2075 = vmatpush1.bf16.msra.mxu0 %v2009
      %2076 = vmatprep.subr.bf16.mxu0 %v2014
      %2077 = vmatpush1.bf16.msra.mxu0 %v2013
      %2078 = vmatprep.subr.bf16.mxu0 %v2018
      %2079 = vmatpush1.bf16.msra.mxu0 %v2017
      %2080 = vmatprep.subr.bf16.mxu0 %v2022
      %2081 = vmatpush1.bf16.msra.mxu0 %v2021
      %2082 = vmatprep.subr.bf16.mxu0 0
      %2083 = vmatpush1.bf16.msra.mxu0 0
      %2084 = vmatprep.subr.bf16.mxu0 0
      %2085 = vmatpush1.bf16.msra.mxu0 0
      %2086 = vmatprep.subr.bf16.mxu0 0
      %2087 = vmatpush1.bf16.msra.mxu0 0
      %2088 = vmatprep.subr.bf16.mxu0 0
      %2089 = vmatpush1.bf16.msra.mxu0 0
      %2090 = vmatprep.subr.bf16.mxu0 0
      %2091 = vmatpush1.bf16.msra.mxu0 0
      %2092 = vmatprep.subr.bf16.mxu0 0
      %2093 = vmatpush1.bf16.msra.mxu0 0
      %2094 = vmatprep.subr.bf16.mxu0 0
      %2095 = vmatpush1.bf16.msra.mxu0 0
      %2096 = vmatprep.subr.bf16.mxu0 0
      %2097 = vmatpush1.bf16.msra.mxu0 0
      %2098 = vmatprep.subr.bf16.mxu0 0
      %2099 = vmatpush1.bf16.msra.mxu0 0
      %2100 = vmatprep.subr.bf16.mxu0 0
      %2101 = vmatpush1.bf16.msra.mxu0 0
      %2102 = vmatprep.subr.bf16.mxu0 0
      %2103 = vmatpush1.bf16.msra.mxu0 0
      %2104 = vmatprep.subr.bf16.mxu0 0
      %2105 = vmatpush1.bf16.msra.mxu0 0
      %2106 = vmatprep.mubr.bf16.mxu0 0
      %2107 = vmatmul.mubr.bf16.gmra.mrb[0].mxu0 %v2031
      %v2108 = vpop.f32.mrb[0].mxu0
      %v2109 = vadd.f32 %v2027, %v2108
      %v2110 = vpop.f32.mrb[0].mxu0
      %v2111 = vadd.f32 %v2027, %v2110
      %v2112 = vpop.f32.mrb[0].mxu0
      %v2113 = vpop.f32.mrb[0].mxu0
      %2114 = vdwg.mxu0
      %v2115 = vadd.f32 %v2068, %v337
      %v2116 = vadd.f32 %v2070, %v341
      %v2117 = vadd.f32 %v2109, %v338
      %v2118 = vadd.f32 %v2111, %v342
      %v2119 = vld [vmem:[%s5] sm:$0xf]
      %v2120 = vpack.c.bf16 %v2115, %v2115
      %v2121 = vpack.c.bf16 %v2116, %v2116
      %v2122 = vpack.c.bf16 %v2117, %v2117
      %v2123 = vpack.c.bf16 %v2118, %v2118
      %v2124 = vld [vmem:[%s6] sm:$0xff]
      %2126 = vset.pattern.permute.xlu0 0
      %2127 = vperm.xlu0 %2126, %v2124
      %v2128 = vpop.permute.xlu0 %2127
      %v2131 = vsel %vm577, %v2119, 0
      %v2134 = vsel %vm614, %v2120, 0
      %v2137 = vsel %vm614, %v2121, 0
      %v2140 = vsel %vm614, %v2122, 0
      %v2143 = vsel %vm614, %v2123, 0
      %2145 = vmatprep.subr.bf16.mxu0 %v2137
      %2146 = vmatpush1.bf16.msra.mxu0 %v2134
      %2147 = vmatprep.subr.bf16.mxu0 0
      %2148 = vmatpush1.bf16.msra.mxu0 0
      %2149 = vmatprep.subr.bf16.mxu0 0
      %2150 = vmatpush1.bf16.msra.mxu0 0
      %2151 = vmatprep.subr.bf16.mxu0 0
      %2152 = vmatpush1.bf16.msra.mxu0 0
      %2153 = vmatprep.subr.bf16.mxu0 0
      %2154 = vmatpush1.bf16.msra.mxu0 0
      %2155 = vmatprep.subr.bf16.mxu0 0
      %2156 = vmatpush1.bf16.msra.mxu0 0
      %2157 = vmatprep.subr.bf16.mxu0 0
      %2158 = vmatpush1.bf16.msra.mxu0 0
      %2159 = vmatprep.subr.bf16.mxu0 0
      %2160 = vmatpush1.bf16.msra.mxu0 0
      %2161 = vmatprep.subr.bf16.mxu0 0
      %2162 = vmatpush1.bf16.msra.mxu0 0
      %2163 = vmatprep.subr.bf16.mxu0 0
      %2164 = vmatpush1.bf16.msra.mxu0 0
      %2165 = vmatprep.subr.bf16.mxu0 0
      %2166 = vmatpush1.bf16.msra.mxu0 0
      %2167 = vmatprep.subr.bf16.mxu0 0
      %2168 = vmatpush1.bf16.msra.mxu0 0
      %2169 = vmatprep.subr.bf16.mxu0 0
      %2170 = vmatpush1.bf16.msra.mxu0 0
      %2171 = vmatprep.subr.bf16.mxu0 0
      %2172 = vmatpush1.bf16.msra.mxu0 0
      %2173 = vmatprep.subr.bf16.mxu0 0
      %2174 = vmatpush1.bf16.msra.mxu0 0
      %2175 = vmatprep.subr.bf16.mxu0 0
      %2176 = vmatpush1.bf16.msra.mxu0 0
      %2177 = vmatprep.mubr.bf16.mxu0 0
      %2178 = vmatmul.mubr.bf16.gmra.mrb[0].mxu0 %v2131
      %v2179 = vpop.f32.mrb[0].mxu0
      %v2180 = vadd.f32 %v2128, %v2179
      %v2181 = vpop.f32.mrb[0].mxu0
      %v2182 = vadd.f32 %v2128, %v2181
      %v2183 = vpop.f32.mrb[0].mxu0
      %v2184 = vpop.f32.mrb[0].mxu0
      %2185 = vdwg.mxu0
      %2186 = vmatprep.subr.bf16.mxu0 %v2143
      %2187 = vmatpush1.bf16.msra.mxu0 %v2140
      %2188 = vmatprep.subr.bf16.mxu0 0
      %2189 = vmatpush1.bf16.msra.mxu0 0
      %2190 = vmatprep.subr.bf16.mxu0 0
      %2191 = vmatpush1.bf16.msra.mxu0 0
      %2192 = vmatprep.subr.bf16.mxu0 0
      %2193 = vmatpush1.bf16.msra.mxu0 0
      %2194 = vmatprep.subr.bf16.mxu0 0
      %2195 = vmatpush1.bf16.msra.mxu0 0
      %2196 = vmatprep.subr.bf16.mxu0 0
      %2197 = vmatpush1.bf16.msra.mxu0 0
      %2198 = vmatprep.subr.bf16.mxu0 0
      %2199 = vmatpush1.bf16.msra.mxu0 0
      %2200 = vmatprep.subr.bf16.mxu0 0
      %2201 = vmatpush1.bf16.msra.mxu0 0
      %2202 = vmatprep.subr.bf16.mxu0 0
      %2203 = vmatpush1.bf16.msra.mxu0 0
      %2204 = vmatprep.subr.bf16.mxu0 0
      %2205 = vmatpush1.bf16.msra.mxu0 0
      %2206 = vmatprep.subr.bf16.mxu0 0
      %2207 = vmatpush1.bf16.msra.mxu0 0
      %2208 = vmatprep.subr.bf16.mxu0 0
      %2209 = vmatpush1.bf16.msra.mxu0 0
      %2210 = vmatprep.subr.bf16.mxu0 0
      %2211 = vmatpush1.bf16.msra.mxu0 0
      %2212 = vmatprep.subr.bf16.mxu0 0
      %2213 = vmatpush1.bf16.msra.mxu0 0
      %2214 = vmatprep.subr.bf16.mxu0 0
      %2215 = vmatpush1.bf16.msra.mxu0 0
      %2216 = vmatprep.subr.bf16.mxu0 0
      %2217 = vmatpush1.bf16.msra.mxu0 0
      %2218 = vmatprep.mubr.bf16.mxu0 0
      %2219 = vmatmul.mubr.bf16.gmra.mrb[0].mxu0 %v2131
      %v2220 = vpop.f32.mrb[0].mxu0
      %v2221 = vadd.f32 %v2128, %v2220
      %v2222 = vpop.f32.mrb[0].mxu0
      %v2223 = vadd.f32 %v2128, %v2222
      %v2224 = vpop.f32.mrb[0].mxu0
      %v2225 = vpop.f32.mrb[0].mxu0
      %2226 = vdwg.mxu0
      %vm2227 = vcmp.gt.f32.partialorder %v2180, 0.0
      %vm2228 = vcmp.gt.f32.partialorder %v2182, 0.0
      %vm2229 = vcmp.gt.f32.partialorder %v2221, 0.0
      %vm2230 = vcmp.gt.f32.partialorder %v2223, 0.0
      %v2231 = vmul.f32 %v2180, 0.2
      %v2232 = vmul.f32 %v2182, 0.2
      %v2233 = vmul.f32 %v2221, 0.2
      %v2234 = vmul.f32 %v2223, 0.2
      %v2235 = vsel %vm2227, %v2180, %v2231
      %v2236 = vsel %vm2228, %v2182, %v2232
      %v2237 = vsel %vm2229, %v2221, %v2233
      %v2238 = vsel %vm2230, %v2223, %v2234
      %v2239 = vld [vmem:[%s7] sm:$0x3]
      %v2240 = vpack.c.bf16 %v2235, %v2235
      %v2241 = vpack.c.bf16 %v2236, %v2236
      %v2242 = vpack.c.bf16 %v2237, %v2237
      %v2243 = vpack.c.bf16 %v2238, %v2238
      %v2244 = vld [vmem:[%s8] sm:$0xf]
      %2246 = vset.pattern.permute.xlu0 0
      %2247 = vperm.xlu0 %2246, %v2244
      %v2248 = vpop.permute.xlu0 %2247
      %vm2250 = vcmask 64512
      %v2252 = vsel %vm2250, %v2239, 0
      %vm2254 = vcmask 1043456
      %v2256 = vsel %vm2254, %v2240, 0
      %v2259 = vsel %vm2254, %v2241, 0
      %v2262 = vsel %vm2254, %v2242, 0
      %v2265 = vsel %vm2254, %v2243, 0
      %2267 = vmatprep.subr.bf16.mxu0 %v2259
      %2268 = vmatpush1.bf16.msra.mxu0 %v2256
      %2269 = vmatprep.subr.bf16.mxu0 0
      %2270 = vmatpush1.bf16.msra.mxu0 0
      %2271 = vmatprep.subr.bf16.mxu0 0
      %2272 = vmatpush1.bf16.msra.mxu0 0
      %2273 = vmatprep.subr.bf16.mxu0 0
      %2274 = vmatpush1.bf16.msra.mxu0 0
      %2275 = vmatprep.subr.bf16.mxu0 0
      %2276 = vmatpush1.bf16.msra.mxu0 0
      %2277 = vmatprep.subr.bf16.mxu0 0
      %2278 = vmatpush1.bf16.msra.mxu0 0
      %2279 = vmatprep.subr.bf16.mxu0 0
      %2280 = vmatpush1.bf16.msra.mxu0 0
      %2281 = vmatprep.subr.bf16.mxu0 0
      %2282 = vmatpush1.bf16.msra.mxu0 0
      %2283 = vmatprep.subr.bf16.mxu0 0
      %2284 = vmatpush1.bf16.msra.mxu0 0
      %2285 = vmatprep.subr.bf16.mxu0 0
      %2286 = vmatpush1.bf16.msra.mxu0 0
      %2287 = vmatprep.subr.bf16.mxu0 0
      %2288 = vmatpush1.bf16.msra.mxu0 0
      %2289 = vmatprep.subr.bf16.mxu0 0
      %2290 = vmatpush1.bf16.msra.mxu0 0
      %2291 = vmatprep.subr.bf16.mxu0 0
      %2292 = vmatpush1.bf16.msra.mxu0 0
      %2293 = vmatprep.subr.bf16.mxu0 0
      %2294 = vmatpush1.bf16.msra.mxu0 0
      %2295 = vmatprep.subr.bf16.mxu0 0
      %2296 = vmatpush1.bf16.msra.mxu0 0
      %2297 = vmatprep.subr.bf16.mxu0 0
      %2298 = vmatpush1.bf16.msra.mxu0 0
      %2299 = vmatprep.mubr.bf16.mxu0 0
      %2300 = vmatmul.mubr.bf16.gmra.mrb[0].mxu0 %v2252
      %v2301 = vpop.f32.mrb[0].mxu0
      %v2302 = vadd.f32 %v2248, %v2301
      %v2303 = vpop.f32.mrb[0].mxu0
      %v2304 = vadd.f32 %v2248, %v2303
      %v2305 = vpop.f32.mrb[0].mxu0
      %v2306 = vpop.f32.mrb[0].mxu0
      %2307 = vdwg.mxu0
      %2308 = vmatprep.subr.bf16.mxu0 %v2265
      %2309 = vmatpush1.bf16.msra.mxu0 %v2262
      %2310 = vmatprep.subr.bf16.mxu0 0
      %2311 = vmatpush1.bf16.msra.mxu0 0
      %2312 = vmatprep.subr.bf16.mxu0 0
      %2313 = vmatpush1.bf16.msra.mxu0 0
      %2314 = vmatprep.subr.bf16.mxu0 0
      %2315 = vmatpush1.bf16.msra.mxu0 0
      %2316 = vmatprep.subr.bf16.mxu0 0
      %2317 = vmatpush1.bf16.msra.mxu0 0
      %2318 = vmatprep.subr.bf16.mxu0 0
      %2319 = vmatpush1.bf16.msra.mxu0 0
      %2320 = vmatprep.subr.bf16.mxu0 0
      %2321 = vmatpush1.bf16.msra.mxu0 0
      %2322 = vmatprep.subr.bf16.mxu0 0
      %2323 = vmatpush1.bf16.msra.mxu0 0
      %2324 = vmatprep.subr.bf16.mxu0 0
      %2325 = vmatpush1.bf16.msra.mxu0 0
      %2326 = vmatprep.subr.bf16.mxu0 0
      %2327 = vmatpush1.bf16.msra.mxu0 0
      %2328 = vmatprep.subr.bf16.mxu0 0
      %2329 = vmatpush1.bf16.msra.mxu0 0
      %2330 = vmatprep.subr.bf16.mxu0 0
      %2331 = vmatpush1.bf16.msra.mxu0 0
      %2332 = vmatprep.subr.bf16.mxu0 0
      %2333 = vmatpush1.bf16.msra.mxu0 0
      %2334 = vmatprep.subr.bf16.mxu0 0
      %2335 = vmatpush1.bf16.msra.mxu0 0
      %2336 = vmatprep.subr.bf16.mxu0 0
      %2337 = vmatpush1.bf16.msra.mxu0 0
      %2338 = vmatprep.subr.bf16.mxu0 0
      %2339 = vmatpush1.bf16.msra.mxu0 0
      %2340 = vmatprep.mubr.bf16.mxu0 0
      %2341 = vmatmul.mubr.bf16.gmra.mrb[0].mxu0 %v2252
      %v2342 = vpop.f32.mrb[0].mxu0
      %v2343 = vadd.f32 %v2248, %v2342
      %v2344 = vpop.f32.mrb[0].mxu0
      %v2345 = vadd.f32 %v2248, %v2344
      %v2346 = vpop.f32.mrb[0].mxu0
      %v2347 = vpop.f32.mrb[0].mxu0
      %2348 = vdwg.mxu0
      %v2349 = vadd.f32 %v2302, %v2115
      %v2350 = vadd.f32 %v2304, %v2116
      %v2351 = vadd.f32 %v2343, %v2117
      %v2352 = vadd.f32 %v2345, %v2118
      %v2357 = vcombine.low %v2349, %v2350
      %v2358 = vcombine.low %v2351, %v2352
      %2361 = vst [vmem:[%s334] sm:$0xff] %v2357
      %2362 = vst [vmem:[%s334 + $0x8] sm:$0xff] %v2358
      %s2363 = smul.u32 4, %s20
      %p2364 = scmp.lt.s32.totalorder %s2363, 7
      %s2365 = scalar_select %p2364, %s2363, 7
      %s2366 = smul.addr %s2365, 4
      %s2367 = scalar_lea.vmem %s9, %s2366
      // Predicated region
      $region57: #{attn_and_ff_forward.1} parent=55 // pred_check
        %p2368 = pneg %p232
      $region58: #{attn_and_ff_forward.1} parent=55 // pred_check_branch
        %2370 = sbr.rel (%p2368) target = $region60
      $region59: #{attn_and_ff_forward.1} parent=55 // pred_region
        %s2371 = smul.u32 4, %s20
      $region60: #{attn_and_ff_forward.1} parent=55 // pred_fallthru
        _
    $region56: #{attn_and_ff_forward.1} parent=5 // pred_fallthru
      _
    %p2372 = scmp.le.s32.totalorder 2, %s15
    // Predicated region
    $region61: #{attn_and_ff_forward.1} parent=5 // pred_check
      %p2373 = pneg %p2372
    $region62: #{attn_and_ff_forward.1} parent=5 // pred_check_branch
      %2375 = sbr.rel (%p2373) target = $region64
    $region63: #{attn_and_ff_forward.1} parent=5 // pred_region
      %s2376 = ssub.s32 %s15, 2
      // Predicated region
      $region65: #{attn_and_ff_forward.1} parent=63 // pred_check
        %p2377 = pneg %p238
      $region66: #{attn_and_ff_forward.1} parent=63 // pred_check_branch
        %2379 = sbr.rel (%p2377) target = $region68
      $region67: #{attn_and_ff_forward.1} parent=63 // pred_region
        %s2380 = smul.u32 4, %s21
        %p2381 = scmp.lt.s32.totalorder %s2380, 7
        %s2382 = scalar_select %p2381, %s2380, 7
        %s2383 = smul.addr %s2382, 4
        %s2384 = scalar_lea.vmem %s9, %s2383
      $region68: #{attn_and_ff_forward.1} parent=63 // pred_fallthru
        _
    $region64: #{attn_and_ff_forward.1} parent=5 // pred_fallthru
      _
  $region6: #{attn_and_ff_forward.1} parent=0 // loop_footer
    %s19 = sadd.s32 1, %s15
  $region7: #{attn_and_ff_forward.1} parent=0 // loop_footer_branch
    %14 = sbr.rel target = $region3
  $region8: #{attn_and_ff_forward.1} parent=0 // loop_exit
    _

</llo_original>
